<compile_context>
chip_gen: v7x
topology: tpu7x:2x2x1
jax: 0.10.0
libtpu: 0.0.40
codegen_flags: <defaults>
</compile_context>

<pallas_src>
import functools

import jax
import jax.numpy as jnp
from jax.experimental import pallas as pl
from jax.experimental.pallas import tpu as pltpu


_VMEM = pl.BlockSpec(memory_space=pltpu.MemorySpace.VMEM)


# ------------------------------- Pallas kernel ------------------------------- #

def svae_kernel(emb_ref, wih_ref, whh_ref, bih_ref, bhh_ref,
                we_ref, be_ref, wmls_ref, bmls_ref, eps_ref,
                wd1_ref, bd1_ref, wd2_ref, bd2_ref,
                dec_ref, mu_ref, logsig_ref,
                h_scratch, *, B, S):
    # emb_ref: (S*B, E) time-major rows; weights pre-transposed to (in, out);
    # dec_ref: (B*S, T), mu_ref/logsig_ref: (B*S, L); h_scratch: (B*S, R) VMEM.
    R = whh_ref.shape[0]

    # ---- GRU: hoisted input projection (one big MXU matmul, input bias folded in) ----
    gi_all = jnp.dot(emb_ref[...], wih_ref[...],
                     preferred_element_type=jnp.float32) + bih_ref[...]      # (S*B, 3R)
    whh = whh_ref[...]
    bhh = jnp.broadcast_to(bhh_ref[...], (B, 3 * R))                          # hoisted

    h = jnp.zeros((B, R), jnp.float32)
    for t in range(S):                                   # static trip count, fully unrolled
        gi = gi_all[t * B:(t + 1) * B, :]                # (B, 3R) contiguous static slice
        gh = jnp.dot(h, whh, preferred_element_type=jnp.float32) + bhh        # (B, 3R)
        i_r, i_z, i_n = gi[:, :R], gi[:, R:2 * R], gi[:, 2 * R:]
        h_r, h_z, h_n = gh[:, :R], gh[:, R:2 * R], gh[:, 2 * R:]
        r = jax.nn.sigmoid(i_r + h_r)
        z = jax.nn.sigmoid(i_z + h_z)
        n = jnp.tanh(i_n + r * h_n)                      # b_hn already inside h_n (PyTorch order)
        h = (1.0 - z) * n + z * h
        # Store batch-major (row = b*S + t) so rnn_flat matches rnn_out.view(B*S, R).
        for b in range(B):
            row = b * S + t
            h_scratch[row:row + 1, :] = h[b:b + 1, :]

    rnn_flat = h_scratch[...]                            # (B*S, R), VMEM-resident

    # ---- Encoder: tanh(Linear) ----
    enc = jnp.tanh(jnp.dot(rnn_flat, we_ref[...],
                           preferred_element_type=jnp.float32) + be_ref[...])

    # ---- sample_latent: single (H, 2L) projection, split into mu / log_sigma ----
    mls = jnp.dot(enc, wmls_ref[...],
                  preferred_element_type=jnp.float32) + bmls_ref[...]        # (N, 2L)
    L = mls.shape[1] // 2
    mu = mls[:, :L]
    log_sigma = mls[:, L:]
    sigma = jnp.exp(log_sigma)
    # TODO(synk): noise could be drawn in-kernel via pltpu.prng_seed/prng_random_bits;
    # kept as an input (stands in for torch's host-side np.random.normal).
    zlat = mu + sigma * eps_ref[...]

    # ---- Decoder: tanh(Linear) -> Linear ----
    d1 = jnp.tanh(jnp.dot(zlat, wd1_ref[...],
                          preferred_element_type=jnp.float32) + bd1_ref[...])
    dec_ref[...] = jnp.dot(d1, wd2_ref[...],
                           preferred_element_type=jnp.float32) + bd2_ref[...]
    mu_ref[...] = mu
    logsig_ref[...] = log_sigma


# -------------------------------- JAX wrappers -------------------------------- #

def svae_fused(emb_tm, eps, params, B, S, hp):
    N = B * S
    R = params["gru_whh"].shape[0]
    L, T = hp["latent_size"], hp["total_items"]
    kernel = functools.partial(svae_kernel, B=B, S=S)
    return pl.pallas_call(
        kernel,
        out_shape=(
            jax.ShapeDtypeStruct((N, T), jnp.float32),
            jax.ShapeDtypeStruct((N, L), jnp.float32),
            jax.ShapeDtypeStruct((N, L), jnp.float32),
        ),
        in_specs=[_VMEM] * 14,
        out_specs=[_VMEM] * 3,
        scratch_shapes=[pltpu.VMEM((N, R), jnp.float32)],
    )(emb_tm,
      params["gru_wih"], params["gru_whh"], params["gru_bih"], params["gru_bhh"],
      params["enc_w"], params["enc_b"],
      params["mls_w"], params["mls_b"],
      eps,
      params["dec1_w"], params["dec1_b"],
      params["dec2_w"], params["dec2_b"])


def svae_forward(params, x, hp, eps_key):
    B, S = x.shape
    L, T = hp["latent_size"], hp["total_items"]
    # Embedding lookup (plain-JAX glue). Time-major row order (t*B + b) for the kernel;
    # only the tiny int32 index array is transposed, no float tensors move.
    emb_tm = jnp.take(params["embed"], x.T.reshape(-1), axis=0)      # (S*B, E)
    eps = jax.random.normal(eps_key, (B * S, L), jnp.float32)
    dec, mu, log_sigma = svae_fused(emb_tm, eps, params, B, S, hp)
    return dec.reshape(B, S, T), mu, log_sigma


# --------------------------- Parameter construction --------------------------- #

def xavier_normal(key, fan_in, fan_out, shape):
    std = (2.0 / (fan_in + fan_out)) ** 0.5
    return std * jax.random.normal(key, shape, jnp.float32)


def uniform(key, k, shape):
    return jax.random.uniform(key, shape, jnp.float32, -k, k)


def init_params(key, hp):
    T, E = hp["total_items"], hp["item_embed_size"]
    R, H, L = hp["rnn_size"], hp["hidden_size"], hp["latent_size"]
    keys = jax.random.split(key, 14)
    kg = 1.0 / (R ** 0.5)
    params = {
        # nn.Embedding default init: N(0, 1)
        "embed": jax.random.normal(keys[0], (T, E), jnp.float32),
        # GRU (gate order r, z, n), pre-transposed to (in, 3R)
        "gru_wih": uniform(keys[1], kg, (E, 3 * R)),
        "gru_whh": uniform(keys[2], kg, (R, 3 * R)),
        "gru_bih": uniform(keys[3], kg, (1, 3 * R)),
        "gru_bhh": uniform(keys[4], kg, (1, 3 * R)),
        # Encoder.linear1: (R -> H), xavier_normal weight
        "enc_w": xavier_normal(keys[5], R, H, (R, H)),
        "enc_b": uniform(keys[6], 1.0 / (R ** 0.5), (1, H)),
        # Model.linear1: (H -> 2L), single merged projection (mu | log_sigma)
        "mls_w": xavier_normal(keys[7], H, 2 * L, (H, 2 * L)),
        "mls_b": uniform(keys[8], 1.0 / (H ** 0.5), (1, 2 * L)),
        # Decoder.linear1: (L -> H), Decoder.linear2: (H -> T)
        "dec1_w": xavier_normal(keys[9], L, H, (L, H)),
        "dec1_b": uniform(keys[10], 1.0 / (L ** 0.5), (1, H)),
        "dec2_w": xavier_normal(keys[11], H, T, (H, T)),
        "dec2_b": uniform(keys[12], 1.0 / (H ** 0.5), (1, T)),
    }
    return params


# ----------------------------------- main ------------------------------------- #

if __name__ == "__main__":
    hyper_params = dict(
        total_items=40,
        item_embed_size=16,
        rnn_size=32,
        hidden_size=32,
        latent_size=8,
    )
    B, S = 2, 8

    root = jax.random.PRNGKey(0)
    k_params, k_x, k_eps = jax.random.split(root, 3)

    params = init_params(k_params, hyper_params)
    x = jax.random.randint(k_x, (B, S), 0, hyper_params["total_items"],
                           dtype=jnp.int32)

    dec_out, z_mean, z_log_sigma = svae_forward(params, x, hyper_params, k_eps)
    jax.block_until_ready((dec_out, z_mean, z_log_sigma))

    assert dec_out.shape == (B, S, hyper_params["total_items"])
    assert z_mean.shape == (B * S, hyper_params["latent_size"])
    assert z_log_sigma.shape == (B * S, hyper_params["latent_size"])
    assert bool(jnp.all(jnp.isfinite(dec_out)))
    print("KERNEL_OK")
</pallas_src>

<mosaic_0001>
module attributes {stable_mosaic.version = 11 : i64} {
  func.func @svae_kernel(%arg0: memref<16x16xf32, #tpu.memory_space<vmem>>, %arg1: memref<16x96xf32, #tpu.memory_space<vmem>>, %arg2: memref<32x96xf32, #tpu.memory_space<vmem>>, %arg3: memref<1x96xf32, #tpu.memory_space<vmem>>, %arg4: memref<1x96xf32, #tpu.memory_space<vmem>>, %arg5: memref<32x32xf32, #tpu.memory_space<vmem>>, %arg6: memref<1x32xf32, #tpu.memory_space<vmem>>, %arg7: memref<32x16xf32, #tpu.memory_space<vmem>>, %arg8: memref<1x16xf32, #tpu.memory_space<vmem>>, %arg9: memref<16x8xf32, #tpu.memory_space<vmem>>, %arg10: memref<8x32xf32, #tpu.memory_space<vmem>>, %arg11: memref<1x32xf32, #tpu.memory_space<vmem>>, %arg12: memref<32x40xf32, #tpu.memory_space<vmem>>, %arg13: memref<1x40xf32, #tpu.memory_space<vmem>>, %arg14: memref<16x40xf32, #tpu.memory_space<vmem>>, %arg15: memref<16x8xf32, #tpu.memory_space<vmem>>, %arg16: memref<16x8xf32, #tpu.memory_space<vmem>>, %arg17: memref<16x32xf32, #tpu.memory_space<vmem>>) attributes {dimension_semantics = [], scalar_prefetch = 0 : i64, scratch_operands = 1 : i64, tpu.core_type = #tpu.core_type<tc>} {
    %c0 = arith.constant 0 : index
    %c0_0 = arith.constant 0 : index
    %0 = vector.load %arg0[%c0, %c0_0] : memref<16x16xf32, #tpu.memory_space<vmem>>, vector<16x16xf32>
    %c0_1 = arith.constant 0 : index
    %c0_2 = arith.constant 0 : index
    %1 = vector.load %arg1[%c0_1, %c0_2] : memref<16x96xf32, #tpu.memory_space<vmem>>, vector<16x96xf32>
    %cst = arith.constant dense<0.000000e+00> : vector<16x96xf32>
    %2 = tpu.matmul %0, %1, %cst {dimension_numbers = #tpu.dot_dimension_numbers<[1], [0], [0], [1], [0, 0, 1, 1], [], []>} : vector<16x16xf32>, vector<16x96xf32>, vector<16x96xf32> -> vector<16x96xf32>
    %c0_3 = arith.constant 0 : index
    %c0_4 = arith.constant 0 : index
    %3 = vector.load %arg3[%c0_3, %c0_4] : memref<1x96xf32, #tpu.memory_space<vmem>>, vector<1x96xf32>
    %4 = vector.broadcast %3 : vector<1x96xf32> to vector<16x96xf32>
    %5 = arith.addf %2, %4 : vector<16x96xf32>
    %c0_5 = arith.constant 0 : index
    %c0_6 = arith.constant 0 : index
    %6 = vector.load %arg2[%c0_5, %c0_6] : memref<32x96xf32, #tpu.memory_space<vmem>>, vector<32x96xf32>
    %c0_7 = arith.constant 0 : index
    %c0_8 = arith.constant 0 : index
    %7 = vector.load %arg4[%c0_7, %c0_8] : memref<1x96xf32, #tpu.memory_space<vmem>>, vector<1x96xf32>
    %8 = vector.shape_cast %7 : vector<1x96xf32> to vector<1x96xf32>
    %9 = vector.broadcast %8 : vector<1x96xf32> to vector<2x96xf32>
    %cst_9 = arith.constant 0.000000e+00 : f32
    %10 = vector.broadcast %cst_9 : f32 to vector<2x32xf32>
    %11 = vector.extract_strided_slice %5 {offsets = [0, 0], sizes = [2, 96], strides = [1, 1]} : vector<16x96xf32> to vector<2x96xf32>
    %cst_10 = arith.constant dense<0.000000e+00> : vector<2x96xf32>
    %12 = tpu.matmul %10, %6, %cst_10 {dimension_numbers = #tpu.dot_dimension_numbers<[1], [0], [0], [1], [0, 0, 1, 1], [], []>} : vector<2x32xf32>, vector<32x96xf32>, vector<2x96xf32> -> vector<2x96xf32>
    %13 = arith.addf %12, %9 : vector<2x96xf32>
    %14 = vector.extract_strided_slice %11 {offsets = [0, 0], sizes = [2, 32], strides = [1, 1]} : vector<2x96xf32> to vector<2x32xf32>
    %15 = vector.extract_strided_slice %11 {offsets = [0, 32], sizes = [2, 32], strides = [1, 1]} : vector<2x96xf32> to vector<2x32xf32>
    %16 = vector.extract_strided_slice %11 {offsets = [0, 64], sizes = [2, 32], strides = [1, 1]} : vector<2x96xf32> to vector<2x32xf32>
    %17 = vector.extract_strided_slice %13 {offsets = [0, 0], sizes = [2, 32], strides = [1, 1]} : vector<2x96xf32> to vector<2x32xf32>
    %18 = vector.extract_strided_slice %13 {offsets = [0, 32], sizes = [2, 32], strides = [1, 1]} : vector<2x96xf32> to vector<2x32xf32>
    %19 = vector.extract_strided_slice %13 {offsets = [0, 64], sizes = [2, 32], strides = [1, 1]} : vector<2x96xf32> to vector<2x32xf32>
    %20 = arith.addf %14, %17 : vector<2x32xf32>
    %21 = arith.negf %20 : vector<2x32xf32>
    %22 = math.exp %21 : vector<2x32xf32>
    %cst_11 = arith.constant 1.000000e+00 : f32
    %23 = vector.broadcast %cst_11 : f32 to vector<2x32xf32>
    %24 = arith.addf %23, %22 : vector<2x32xf32>
    %25 = arith.divf %23, %24 : vector<2x32xf32>
    %26 = arith.addf %15, %18 : vector<2x32xf32>
    %27 = arith.negf %26 : vector<2x32xf32>
    %28 = math.exp %27 : vector<2x32xf32>
    %cst_12 = arith.constant 1.000000e+00 : f32
    %29 = vector.broadcast %cst_12 : f32 to vector<2x32xf32>
    %30 = arith.addf %29, %28 : vector<2x32xf32>
    %31 = arith.divf %29, %30 : vector<2x32xf32>
    %32 = arith.mulf %25, %19 : vector<2x32xf32>
    %33 = arith.addf %16, %32 : vector<2x32xf32>
    %34 = math.tanh %33 : vector<2x32xf32>
    %cst_13 = arith.constant 1.000000e+00 : f32
    %35 = vector.broadcast %cst_13 : f32 to vector<2x32xf32>
    %36 = arith.subf %35, %31 : vector<2x32xf32>
    %37 = arith.mulf %36, %34 : vector<2x32xf32>
    %38 = arith.mulf %31, %10 : vector<2x32xf32>
    %39 = arith.addf %37, %38 : vector<2x32xf32>
    %40 = vector.extract_strided_slice %39 {offsets = [0, 0], sizes = [1, 32], strides = [1, 1]} : vector<2x32xf32> to vector<1x32xf32>
    %c0_14 = arith.constant 0 : index
    %c0_15 = arith.constant 0 : index
    %41 = vector.load %arg17[%c0_14, %c0_15] : memref<16x32xf32, #tpu.memory_space<vmem>>, vector<1x32xf32>
    tpu.vector_store %arg17[%c0_14, %c0_15], %40 {strides = array<i32>} : memref<16x32xf32, #tpu.memory_space<vmem>>, vector<1x32xf32>,
    %42 = vector.extract_strided_slice %39 {offsets = [1, 0], sizes = [1, 32], strides = [1, 1]} : vector<2x32xf32> to vector<1x32xf32>
    %c8 = arith.constant 8 : index
    %c0_16 = arith.constant 0 : index
    %43 = vector.load %arg17[%c8, %c0_16] : memref<16x32xf32, #tpu.memory_space<vmem>>, vector<1x32xf32>
    tpu.vector_store %arg17[%c8, %c0_16], %42 {strides = array<i32>} : memref<16x32xf32, #tpu.memory_space<vmem>>, vector<1x32xf32>,
    %44 = vector.extract_strided_slice %5 {offsets = [2, 0], sizes = [2, 96], strides = [1, 1]} : vector<16x96xf32> to vector<2x96xf32>
    %cst_17 = arith.constant dense<0.000000e+00> : vector<2x96xf32>
    %45 = tpu.matmul %39, %6, %cst_17 {dimension_numbers = #tpu.dot_dimension_numbers<[1], [0], [0], [1], [0, 0, 1, 1], [], []>} : vector<2x32xf32>, vector<32x96xf32>, vector<2x96xf32> -> vector<2x96xf32>
    %46 = arith.addf %45, %9 : vector<2x96xf32>
    %47 = vector.extract_strided_slice %44 {offsets = [0, 0], sizes = [2, 32], strides = [1, 1]} : vector<2x96xf32> to vector<2x32xf32>
    %48 = vector.extract_strided_slice %44 {offsets = [0, 32], sizes = [2, 32], strides = [1, 1]} : vector<2x96xf32> to vector<2x32xf32>
    %49 = vector.extract_strided_slice %44 {offsets = [0, 64], sizes = [2, 32], strides = [1, 1]} : vector<2x96xf32> to vector<2x32xf32>
    %50 = vector.extract_strided_slice %46 {offsets = [0, 0], sizes = [2, 32], strides = [1, 1]} : vector<2x96xf32> to vector<2x32xf32>
    %51 = vector.extract_strided_slice %46 {offsets = [0, 32], sizes = [2, 32], strides = [1, 1]} : vector<2x96xf32> to vector<2x32xf32>
    %52 = vector.extract_strided_slice %46 {offsets = [0, 64], sizes = [2, 32], strides = [1, 1]} : vector<2x96xf32> to vector<2x32xf32>
    %53 = arith.addf %47, %50 : vector<2x32xf32>
    %54 = arith.negf %53 : vector<2x32xf32>
    %55 = math.exp %54 : vector<2x32xf32>
    %cst_18 = arith.constant 1.000000e+00 : f32
    %56 = vector.broadcast %cst_18 : f32 to vector<2x32xf32>
    %57 = arith.addf %56, %55 : vector<2x32xf32>
    %58 = arith.divf %56, %57 : vector<2x32xf32>
    %59 = arith.addf %48, %51 : vector<2x32xf32>
    %60 = arith.negf %59 : vector<2x32xf32>
    %61 = math.exp %60 : vector<2x32xf32>
    %cst_19 = arith.constant 1.000000e+00 : f32
    %62 = vector.broadcast %cst_19 : f32 to vector<2x32xf32>
    %63 = arith.addf %62, %61 : vector<2x32xf32>
    %64 = arith.divf %62, %63 : vector<2x32xf32>
    %65 = arith.mulf %58, %52 : vector<2x32xf32>
    %66 = arith.addf %49, %65 : vector<2x32xf32>
    %67 = math.tanh %66 : vector<2x32xf32>
    %cst_20 = arith.constant 1.000000e+00 : f32
    %68 = vector.broadcast %cst_20 : f32 to vector<2x32xf32>
    %69 = arith.subf %68, %64 : vector<2x32xf32>
    %70 = arith.mulf %69, %67 : vector<2x32xf32>
    %71 = arith.mulf %64, %39 : vector<2x32xf32>
    %72 = arith.addf %70, %71 : vector<2x32xf32>
    %73 = vector.extract_strided_slice %72 {offsets = [0, 0], sizes = [1, 32], strides = [1, 1]} : vector<2x32xf32> to vector<1x32xf32>
    %c1 = arith.constant 1 : index
    %c0_21 = arith.constant 0 : index
    %74 = vector.load %arg17[%c1, %c0_21] : memref<16x32xf32, #tpu.memory_space<vmem>>, vector<1x32xf32>
    tpu.vector_store %arg17[%c1, %c0_21], %73 {strides = array<i32>} : memref<16x32xf32, #tpu.memory_space<vmem>>, vector<1x32xf32>,
    %75 = vector.extract_strided_slice %72 {offsets = [1, 0], sizes = [1, 32], strides = [1, 1]} : vector<2x32xf32> to vector<1x32xf32>
    %c9 = arith.constant 9 : index
    %c0_22 = arith.constant 0 : index
    %76 = vector.load %arg17[%c9, %c0_22] : memref<16x32xf32, #tpu.memory_space<vmem>>, vector<1x32xf32>
    tpu.vector_store %arg17[%c9, %c0_22], %75 {strides = array<i32>} : memref<16x32xf32, #tpu.memory_space<vmem>>, vector<1x32xf32>,
    %77 = vector.extract_strided_slice %5 {offsets = [4, 0], sizes = [2, 96], strides = [1, 1]} : vector<16x96xf32> to vector<2x96xf32>
    %cst_23 = arith.constant dense<0.000000e+00> : vector<2x96xf32>
    %78 = tpu.matmul %72, %6, %cst_23 {dimension_numbers = #tpu.dot_dimension_numbers<[1], [0], [0], [1], [0, 0, 1, 1], [], []>} : vector<2x32xf32>, vector<32x96xf32>, vector<2x96xf32> -> vector<2x96xf32>
    %79 = arith.addf %78, %9 : vector<2x96xf32>
    %80 = vector.extract_strided_slice %77 {offsets = [0, 0], sizes = [2, 32], strides = [1, 1]} : vector<2x96xf32> to vector<2x32xf32>
    %81 = vector.extract_strided_slice %77 {offsets = [0, 32], sizes = [2, 32], strides = [1, 1]} : vector<2x96xf32> to vector<2x32xf32>
    %82 = vector.extract_strided_slice %77 {offsets = [0, 64], sizes = [2, 32], strides = [1, 1]} : vector<2x96xf32> to vector<2x32xf32>
    %83 = vector.extract_strided_slice %79 {offsets = [0, 0], sizes = [2, 32], strides = [1, 1]} : vector<2x96xf32> to vector<2x32xf32>
    %84 = vector.extract_strided_slice %79 {offsets = [0, 32], sizes = [2, 32], strides = [1, 1]} : vector<2x96xf32> to vector<2x32xf32>
    %85 = vector.extract_strided_slice %79 {offsets = [0, 64], sizes = [2, 32], strides = [1, 1]} : vector<2x96xf32> to vector<2x32xf32>
    %86 = arith.addf %80, %83 : vector<2x32xf32>
    %87 = arith.negf %86 : vector<2x32xf32>
    %88 = math.exp %87 : vector<2x32xf32>
    %cst_24 = arith.constant 1.000000e+00 : f32
    %89 = vector.broadcast %cst_24 : f32 to vector<2x32xf32>
    %90 = arith.addf %89, %88 : vector<2x32xf32>
    %91 = arith.divf %89, %90 : vector<2x32xf32>
    %92 = arith.addf %81, %84 : vector<2x32xf32>
    %93 = arith.negf %92 : vector<2x32xf32>
    %94 = math.exp %93 : vector<2x32xf32>
    %cst_25 = arith.constant 1.000000e+00 : f32
    %95 = vector.broadcast %cst_25 : f32 to vector<2x32xf32>
    %96 = arith.addf %95, %94 : vector<2x32xf32>
    %97 = arith.divf %95, %96 : vector<2x32xf32>
    %98 = arith.mulf %91, %85 : vector<2x32xf32>
    %99 = arith.addf %82, %98 : vector<2x32xf32>
    %100 = math.tanh %99 : vector<2x32xf32>
    %cst_26 = arith.constant 1.000000e+00 : f32
    %101 = vector.broadcast %cst_26 : f32 to vector<2x32xf32>
    %102 = arith.subf %101, %97 : vector<2x32xf32>
    %103 = arith.mulf %102, %100 : vector<2x32xf32>
    %104 = arith.mulf %97, %72 : vector<2x32xf32>
    %105 = arith.addf %103, %104 : vector<2x32xf32>
    %106 = vector.extract_strided_slice %105 {offsets = [0, 0], sizes = [1, 32], strides = [1, 1]} : vector<2x32xf32> to vector<1x32xf32>
    %c2 = arith.constant 2 : index
    %c0_27 = arith.constant 0 : index
    %107 = vector.load %arg17[%c2, %c0_27] : memref<16x32xf32, #tpu.memory_space<vmem>>, vector<1x32xf32>
    tpu.vector_store %arg17[%c2, %c0_27], %106 {strides = array<i32>} : memref<16x32xf32, #tpu.memory_space<vmem>>, vector<1x32xf32>,
    %108 = vector.extract_strided_slice %105 {offsets = [1, 0], sizes = [1, 32], strides = [1, 1]} : vector<2x32xf32> to vector<1x32xf32>
    %c10 = arith.constant 10 : index
    %c0_28 = arith.constant 0 : index
    %109 = vector.load %arg17[%c10, %c0_28] : memref<16x32xf32, #tpu.memory_space<vmem>>, vector<1x32xf32>
    tpu.vector_store %arg17[%c10, %c0_28], %108 {strides = array<i32>} : memref<16x32xf32, #tpu.memory_space<vmem>>, vector<1x32xf32>,
    %110 = vector.extract_strided_slice %5 {offsets = [6, 0], sizes = [2, 96], strides = [1, 1]} : vector<16x96xf32> to vector<2x96xf32>
    %cst_29 = arith.constant dense<0.000000e+00> : vector<2x96xf32>
    %111 = tpu.matmul %105, %6, %cst_29 {dimension_numbers = #tpu.dot_dimension_numbers<[1], [0], [0], [1], [0, 0, 1, 1], [], []>} : vector<2x32xf32>, vector<32x96xf32>, vector<2x96xf32> -> vector<2x96xf32>
    %112 = arith.addf %111, %9 : vector<2x96xf32>
    %113 = vector.extract_strided_slice %110 {offsets = [0, 0], sizes = [2, 32], strides = [1, 1]} : vector<2x96xf32> to vector<2x32xf32>
    %114 = vector.extract_strided_slice %110 {offsets = [0, 32], sizes = [2, 32], strides = [1, 1]} : vector<2x96xf32> to vector<2x32xf32>
    %115 = vector.extract_strided_slice %110 {offsets = [0, 64], sizes = [2, 32], strides = [1, 1]} : vector<2x96xf32> to vector<2x32xf32>
    %116 = vector.extract_strided_slice %112 {offsets = [0, 0], sizes = [2, 32], strides = [1, 1]} : vector<2x96xf32> to vector<2x32xf32>
    %117 = vector.extract_strided_slice %112 {offsets = [0, 32], sizes = [2, 32], strides = [1, 1]} : vector<2x96xf32> to vector<2x32xf32>
    %118 = vector.extract_strided_slice %112 {offsets = [0, 64], sizes = [2, 32], strides = [1, 1]} : vector<2x96xf32> to vector<2x32xf32>
    %119 = arith.addf %113, %116 : vector<2x32xf32>
    %120 = arith.negf %119 : vector<2x32xf32>
    %121 = math.exp %120 : vector<2x32xf32>
    %cst_30 = arith.constant 1.000000e+00 : f32
    %122 = vector.broadcast %cst_30 : f32 to vector<2x32xf32>
    %123 = arith.addf %122, %121 : vector<2x32xf32>
    %124 = arith.divf %122, %123 : vector<2x32xf32>
    %125 = arith.addf %114, %117 : vector<2x32xf32>
    %126 = arith.negf %125 : vector<2x32xf32>
    %127 = math.exp %126 : vector<2x32xf32>
    %cst_31 = arith.constant 1.000000e+00 : f32
    %128 = vector.broadcast %cst_31 : f32 to vector<2x32xf32>
    %129 = arith.addf %128, %127 : vector<2x32xf32>
    %130 = arith.divf %128, %129 : vector<2x32xf32>
    %131 = arith.mulf %124, %118 : vector<2x32xf32>
    %132 = arith.addf %115, %131 : vector<2x32xf32>
    %133 = math.tanh %132 : vector<2x32xf32>
    %cst_32 = arith.constant 1.000000e+00 : f32
    %134 = vector.broadcast %cst_32 : f32 to vector<2x32xf32>
    %135 = arith.subf %134, %130 : vector<2x32xf32>
    %136 = arith.mulf %135, %133 : vector<2x32xf32>
    %137 = arith.mulf %130, %105 : vector<2x32xf32>
    %138 = arith.addf %136, %137 : vector<2x32xf32>
    %139 = vector.extract_strided_slice %138 {offsets = [0, 0], sizes = [1, 32], strides = [1, 1]} : vector<2x32xf32> to vector<1x32xf32>
    %c3 = arith.constant 3 : index
    %c0_33 = arith.constant 0 : index
    %140 = vector.load %arg17[%c3, %c0_33] : memref<16x32xf32, #tpu.memory_space<vmem>>, vector<1x32xf32>
    tpu.vector_store %arg17[%c3, %c0_33], %139 {strides = array<i32>} : memref<16x32xf32, #tpu.memory_space<vmem>>, vector<1x32xf32>,
    %141 = vector.extract_strided_slice %138 {offsets = [1, 0], sizes = [1, 32], strides = [1, 1]} : vector<2x32xf32> to vector<1x32xf32>
    %c11 = arith.constant 11 : index
    %c0_34 = arith.constant 0 : index
    %142 = vector.load %arg17[%c11, %c0_34] : memref<16x32xf32, #tpu.memory_space<vmem>>, vector<1x32xf32>
    tpu.vector_store %arg17[%c11, %c0_34], %141 {strides = array<i32>} : memref<16x32xf32, #tpu.memory_space<vmem>>, vector<1x32xf32>,
    %143 = vector.extract_strided_slice %5 {offsets = [8, 0], sizes = [2, 96], strides = [1, 1]} : vector<16x96xf32> to vector<2x96xf32>
    %cst_35 = arith.constant dense<0.000000e+00> : vector<2x96xf32>
    %144 = tpu.matmul %138, %6, %cst_35 {dimension_numbers = #tpu.dot_dimension_numbers<[1], [0], [0], [1], [0, 0, 1, 1], [], []>} : vector<2x32xf32>, vector<32x96xf32>, vector<2x96xf32> -> vector<2x96xf32>
    %145 = arith.addf %144, %9 : vector<2x96xf32>
    %146 = vector.extract_strided_slice %143 {offsets = [0, 0], sizes = [2, 32], strides = [1, 1]} : vector<2x96xf32> to vector<2x32xf32>
    %147 = vector.extract_strided_slice %143 {offsets = [0, 32], sizes = [2, 32], strides = [1, 1]} : vector<2x96xf32> to vector<2x32xf32>
    %148 = vector.extract_strided_slice %143 {offsets = [0, 64], sizes = [2, 32], strides = [1, 1]} : vector<2x96xf32> to vector<2x32xf32>
    %149 = vector.extract_strided_slice %145 {offsets = [0, 0], sizes = [2, 32], strides = [1, 1]} : vector<2x96xf32> to vector<2x32xf32>
    %150 = vector.extract_strided_slice %145 {offsets = [0, 32], sizes = [2, 32], strides = [1, 1]} : vector<2x96xf32> to vector<2x32xf32>
    %151 = vector.extract_strided_slice %145 {offsets = [0, 64], sizes = [2, 32], strides = [1, 1]} : vector<2x96xf32> to vector<2x32xf32>
    %152 = arith.addf %146, %149 : vector<2x32xf32>
    %153 = arith.negf %152 : vector<2x32xf32>
    %154 = math.exp %153 : vector<2x32xf32>
    %cst_36 = arith.constant 1.000000e+00 : f32
    %155 = vector.broadcast %cst_36 : f32 to vector<2x32xf32>
    %156 = arith.addf %155, %154 : vector<2x32xf32>
    %157 = arith.divf %155, %156 : vector<2x32xf32>
    %158 = arith.addf %147, %150 : vector<2x32xf32>
    %159 = arith.negf %158 : vector<2x32xf32>
    %160 = math.exp %159 : vector<2x32xf32>
    %cst_37 = arith.constant 1.000000e+00 : f32
    %161 = vector.broadcast %cst_37 : f32 to vector<2x32xf32>
    %162 = arith.addf %161, %160 : vector<2x32xf32>
    %163 = arith.divf %161, %162 : vector<2x32xf32>
    %164 = arith.mulf %157, %151 : vector<2x32xf32>
    %165 = arith.addf %148, %164 : vector<2x32xf32>
    %166 = math.tanh %165 : vector<2x32xf32>
    %cst_38 = arith.constant 1.000000e+00 : f32
    %167 = vector.broadcast %cst_38 : f32 to vector<2x32xf32>
    %168 = arith.subf %167, %163 : vector<2x32xf32>
    %169 = arith.mulf %168, %166 : vector<2x32xf32>
    %170 = arith.mulf %163, %138 : vector<2x32xf32>
    %171 = arith.addf %169, %170 : vector<2x32xf32>
    %172 = vector.extract_strided_slice %171 {offsets = [0, 0], sizes = [1, 32], strides = [1, 1]} : vector<2x32xf32> to vector<1x32xf32>
    %c4 = arith.constant 4 : index
    %c0_39 = arith.constant 0 : index
    %173 = vector.load %arg17[%c4, %c0_39] : memref<16x32xf32, #tpu.memory_space<vmem>>, vector<1x32xf32>
    tpu.vector_store %arg17[%c4, %c0_39], %172 {strides = array<i32>} : memref<16x32xf32, #tpu.memory_space<vmem>>, vector<1x32xf32>,
    %174 = vector.extract_strided_slice %171 {offsets = [1, 0], sizes = [1, 32], strides = [1, 1]} : vector<2x32xf32> to vector<1x32xf32>
    %c12 = arith.constant 12 : index
    %c0_40 = arith.constant 0 : index
    %175 = vector.load %arg17[%c12, %c0_40] : memref<16x32xf32, #tpu.memory_space<vmem>>, vector<1x32xf32>
    tpu.vector_store %arg17[%c12, %c0_40], %174 {strides = array<i32>} : memref<16x32xf32, #tpu.memory_space<vmem>>, vector<1x32xf32>,
    %176 = vector.extract_strided_slice %5 {offsets = [10, 0], sizes = [2, 96], strides = [1, 1]} : vector<16x96xf32> to vector<2x96xf32>
    %cst_41 = arith.constant dense<0.000000e+00> : vector<2x96xf32>
    %177 = tpu.matmul %171, %6, %cst_41 {dimension_numbers = #tpu.dot_dimension_numbers<[1], [0], [0], [1], [0, 0, 1, 1], [], []>} : vector<2x32xf32>, vector<32x96xf32>, vector<2x96xf32> -> vector<2x96xf32>
    %178 = arith.addf %177, %9 : vector<2x96xf32>
    %179 = vector.extract_strided_slice %176 {offsets = [0, 0], sizes = [2, 32], strides = [1, 1]} : vector<2x96xf32> to vector<2x32xf32>
    %180 = vector.extract_strided_slice %176 {offsets = [0, 32], sizes = [2, 32], strides = [1, 1]} : vector<2x96xf32> to vector<2x32xf32>
    %181 = vector.extract_strided_slice %176 {offsets = [0, 64], sizes = [2, 32], strides = [1, 1]} : vector<2x96xf32> to vector<2x32xf32>
    %182 = vector.extract_strided_slice %178 {offsets = [0, 0], sizes = [2, 32], strides = [1, 1]} : vector<2x96xf32> to vector<2x32xf32>
    %183 = vector.extract_strided_slice %178 {offsets = [0, 32], sizes = [2, 32], strides = [1, 1]} : vector<2x96xf32> to vector<2x32xf32>
    %184 = vector.extract_strided_slice %178 {offsets = [0, 64], sizes = [2, 32], strides = [1, 1]} : vector<2x96xf32> to vector<2x32xf32>
    %185 = arith.addf %179, %182 : vector<2x32xf32>
    %186 = arith.negf %185 : vector<2x32xf32>
    %187 = math.exp %186 : vector<2x32xf32>
    %cst_42 = arith.constant 1.000000e+00 : f32
    %188 = vector.broadcast %cst_42 : f32 to vector<2x32xf32>
    %189 = arith.addf %188, %187 : vector<2x32xf32>
    %190 = arith.divf %188, %189 : vector<2x32xf32>
    %191 = arith.addf %180, %183 : vector<2x32xf32>
    %192 = arith.negf %191 : vector<2x32xf32>
    %193 = math.exp %192 : vector<2x32xf32>
    %cst_43 = arith.constant 1.000000e+00 : f32
    %194 = vector.broadcast %cst_43 : f32 to vector<2x32xf32>
    %195 = arith.addf %194, %193 : vector<2x32xf32>
    %196 = arith.divf %194, %195 : vector<2x32xf32>
    %197 = arith.mulf %190, %184 : vector<2x32xf32>
    %198 = arith.addf %181, %197 : vector<2x32xf32>
    %199 = math.tanh %198 : vector<2x32xf32>
    %cst_44 = arith.constant 1.000000e+00 : f32
    %200 = vector.broadcast %cst_44 : f32 to vector<2x32xf32>
    %201 = arith.subf %200, %196 : vector<2x32xf32>
    %202 = arith.mulf %201, %199 : vector<2x32xf32>
    %203 = arith.mulf %196, %171 : vector<2x32xf32>
    %204 = arith.addf %202, %203 : vector<2x32xf32>
    %205 = vector.extract_strided_slice %204 {offsets = [0, 0], sizes = [1, 32], strides = [1, 1]} : vector<2x32xf32> to vector<1x32xf32>
    %c5 = arith.constant 5 : index
    %c0_45 = arith.constant 0 : index
    %206 = vector.load %arg17[%c5, %c0_45] : memref<16x32xf32, #tpu.memory_space<vmem>>, vector<1x32xf32>
    tpu.vector_store %arg17[%c5, %c0_45], %205 {strides = array<i32>} : memref<16x32xf32, #tpu.memory_space<vmem>>, vector<1x32xf32>,
    %207 = vector.extract_strided_slice %204 {offsets = [1, 0], sizes = [1, 32], strides = [1, 1]} : vector<2x32xf32> to vector<1x32xf32>
    %c13 = arith.constant 13 : index
    %c0_46 = arith.constant 0 : index
    %208 = vector.load %arg17[%c13, %c0_46] : memref<16x32xf32, #tpu.memory_space<vmem>>, vector<1x32xf32>
    tpu.vector_store %arg17[%c13, %c0_46], %207 {strides = array<i32>} : memref<16x32xf32, #tpu.memory_space<vmem>>, vector<1x32xf32>,
    %209 = vector.extract_strided_slice %5 {offsets = [12, 0], sizes = [2, 96], strides = [1, 1]} : vector<16x96xf32> to vector<2x96xf32>
    %cst_47 = arith.constant dense<0.000000e+00> : vector<2x96xf32>
    %210 = tpu.matmul %204, %6, %cst_47 {dimension_numbers = #tpu.dot_dimension_numbers<[1], [0], [0], [1], [0, 0, 1, 1], [], []>} : vector<2x32xf32>, vector<32x96xf32>, vector<2x96xf32> -> vector<2x96xf32>
    %211 = arith.addf %210, %9 : vector<2x96xf32>
    %212 = vector.extract_strided_slice %209 {offsets = [0, 0], sizes = [2, 32], strides = [1, 1]} : vector<2x96xf32> to vector<2x32xf32>
    %213 = vector.extract_strided_slice %209 {offsets = [0, 32], sizes = [2, 32], strides = [1, 1]} : vector<2x96xf32> to vector<2x32xf32>
    %214 = vector.extract_strided_slice %209 {offsets = [0, 64], sizes = [2, 32], strides = [1, 1]} : vector<2x96xf32> to vector<2x32xf32>
    %215 = vector.extract_strided_slice %211 {offsets = [0, 0], sizes = [2, 32], strides = [1, 1]} : vector<2x96xf32> to vector<2x32xf32>
    %216 = vector.extract_strided_slice %211 {offsets = [0, 32], sizes = [2, 32], strides = [1, 1]} : vector<2x96xf32> to vector<2x32xf32>
    %217 = vector.extract_strided_slice %211 {offsets = [0, 64], sizes = [2, 32], strides = [1, 1]} : vector<2x96xf32> to vector<2x32xf32>
    %218 = arith.addf %212, %215 : vector<2x32xf32>
    %219 = arith.negf %218 : vector<2x32xf32>
    %220 = math.exp %219 : vector<2x32xf32>
    %cst_48 = arith.constant 1.000000e+00 : f32
    %221 = vector.broadcast %cst_48 : f32 to vector<2x32xf32>
    %222 = arith.addf %221, %220 : vector<2x32xf32>
    %223 = arith.divf %221, %222 : vector<2x32xf32>
    %224 = arith.addf %213, %216 : vector<2x32xf32>
    %225 = arith.negf %224 : vector<2x32xf32>
    %226 = math.exp %225 : vector<2x32xf32>
    %cst_49 = arith.constant 1.000000e+00 : f32
    %227 = vector.broadcast %cst_49 : f32 to vector<2x32xf32>
    %228 = arith.addf %227, %226 : vector<2x32xf32>
    %229 = arith.divf %227, %228 : vector<2x32xf32>
    %230 = arith.mulf %223, %217 : vector<2x32xf32>
    %231 = arith.addf %214, %230 : vector<2x32xf32>
    %232 = math.tanh %231 : vector<2x32xf32>
    %cst_50 = arith.constant 1.000000e+00 : f32
    %233 = vector.broadcast %cst_50 : f32 to vector<2x32xf32>
    %234 = arith.subf %233, %229 : vector<2x32xf32>
    %235 = arith.mulf %234, %232 : vector<2x32xf32>
    %236 = arith.mulf %229, %204 : vector<2x32xf32>
    %237 = arith.addf %235, %236 : vector<2x32xf32>
    %238 = vector.extract_strided_slice %237 {offsets = [0, 0], sizes = [1, 32], strides = [1, 1]} : vector<2x32xf32> to vector<1x32xf32>
    %c6 = arith.constant 6 : index
    %c0_51 = arith.constant 0 : index
    %239 = vector.load %arg17[%c6, %c0_51] : memref<16x32xf32, #tpu.memory_space<vmem>>, vector<1x32xf32>
    tpu.vector_store %arg17[%c6, %c0_51], %238 {strides = array<i32>} : memref<16x32xf32, #tpu.memory_space<vmem>>, vector<1x32xf32>,
    %240 = vector.extract_strided_slice %237 {offsets = [1, 0], sizes = [1, 32], strides = [1, 1]} : vector<2x32xf32> to vector<1x32xf32>
    %c14 = arith.constant 14 : index
    %c0_52 = arith.constant 0 : index
    %241 = vector.load %arg17[%c14, %c0_52] : memref<16x32xf32, #tpu.memory_space<vmem>>, vector<1x32xf32>
    tpu.vector_store %arg17[%c14, %c0_52], %240 {strides = array<i32>} : memref<16x32xf32, #tpu.memory_space<vmem>>, vector<1x32xf32>,
    %242 = vector.extract_strided_slice %5 {offsets = [14, 0], sizes = [2, 96], strides = [1, 1]} : vector<16x96xf32> to vector<2x96xf32>
    %cst_53 = arith.constant dense<0.000000e+00> : vector<2x96xf32>
    %243 = tpu.matmul %237, %6, %cst_53 {dimension_numbers = #tpu.dot_dimension_numbers<[1], [0], [0], [1], [0, 0, 1, 1], [], []>} : vector<2x32xf32>, vector<32x96xf32>, vector<2x96xf32> -> vector<2x96xf32>
    %244 = arith.addf %243, %9 : vector<2x96xf32>
    %245 = vector.extract_strided_slice %242 {offsets = [0, 0], sizes = [2, 32], strides = [1, 1]} : vector<2x96xf32> to vector<2x32xf32>
    %246 = vector.extract_strided_slice %242 {offsets = [0, 32], sizes = [2, 32], strides = [1, 1]} : vector<2x96xf32> to vector<2x32xf32>
    %247 = vector.extract_strided_slice %242 {offsets = [0, 64], sizes = [2, 32], strides = [1, 1]} : vector<2x96xf32> to vector<2x32xf32>
    %248 = vector.extract_strided_slice %244 {offsets = [0, 0], sizes = [2, 32], strides = [1, 1]} : vector<2x96xf32> to vector<2x32xf32>
    %249 = vector.extract_strided_slice %244 {offsets = [0, 32], sizes = [2, 32], strides = [1, 1]} : vector<2x96xf32> to vector<2x32xf32>
    %250 = vector.extract_strided_slice %244 {offsets = [0, 64], sizes = [2, 32], strides = [1, 1]} : vector<2x96xf32> to vector<2x32xf32>
    %251 = arith.addf %245, %248 : vector<2x32xf32>
    %252 = arith.negf %251 : vector<2x32xf32>
    %253 = math.exp %252 : vector<2x32xf32>
    %cst_54 = arith.constant 1.000000e+00 : f32
    %254 = vector.broadcast %cst_54 : f32 to vector<2x32xf32>
    %255 = arith.addf %254, %253 : vector<2x32xf32>
    %256 = arith.divf %254, %255 : vector<2x32xf32>
    %257 = arith.addf %246, %249 : vector<2x32xf32>
    %258 = arith.negf %257 : vector<2x32xf32>
    %259 = math.exp %258 : vector<2x32xf32>
    %cst_55 = arith.constant 1.000000e+00 : f32
    %260 = vector.broadcast %cst_55 : f32 to vector<2x32xf32>
    %261 = arith.addf %260, %259 : vector<2x32xf32>
    %262 = arith.divf %260, %261 : vector<2x32xf32>
    %263 = arith.mulf %256, %250 : vector<2x32xf32>
    %264 = arith.addf %247, %263 : vector<2x32xf32>
    %265 = math.tanh %264 : vector<2x32xf32>
    %cst_56 = arith.constant 1.000000e+00 : f32
    %266 = vector.broadcast %cst_56 : f32 to vector<2x32xf32>
    %267 = arith.subf %266, %262 : vector<2x32xf32>
    %268 = arith.mulf %267, %265 : vector<2x32xf32>
    %269 = arith.mulf %262, %237 : vector<2x32xf32>
    %270 = arith.addf %268, %269 : vector<2x32xf32>
    %271 = vector.extract_strided_slice %270 {offsets = [0, 0], sizes = [1, 32], strides = [1, 1]} : vector<2x32xf32> to vector<1x32xf32>
    %c7 = arith.constant 7 : index
    %c0_57 = arith.constant 0 : index
    %272 = vector.load %arg17[%c7, %c0_57] : memref<16x32xf32, #tpu.memory_space<vmem>>, vector<1x32xf32>
    tpu.vector_store %arg17[%c7, %c0_57], %271 {strides = array<i32>} : memref<16x32xf32, #tpu.memory_space<vmem>>, vector<1x32xf32>,
    %273 = vector.extract_strided_slice %270 {offsets = [1, 0], sizes = [1, 32], strides = [1, 1]} : vector<2x32xf32> to vector<1x32xf32>
    %c15 = arith.constant 15 : index
    %c0_58 = arith.constant 0 : index
    %274 = vector.load %arg17[%c15, %c0_58] : memref<16x32xf32, #tpu.memory_space<vmem>>, vector<1x32xf32>
    tpu.vector_store %arg17[%c15, %c0_58], %273 {strides = array<i32>} : memref<16x32xf32, #tpu.memory_space<vmem>>, vector<1x32xf32>,
    %c0_59 = arith.constant 0 : index
    %c0_60 = arith.constant 0 : index
    %275 = vector.load %arg17[%c0_59, %c0_60] : memref<16x32xf32, #tpu.memory_space<vmem>>, vector<16x32xf32>
    %c0_61 = arith.constant 0 : index
    %c0_62 = arith.constant 0 : index
    %276 = vector.load %arg5[%c0_61, %c0_62] : memref<32x32xf32, #tpu.memory_space<vmem>>, vector<32x32xf32>
    %cst_63 = arith.constant dense<0.000000e+00> : vector<16x32xf32>
    %277 = tpu.matmul %275, %276, %cst_63 {dimension_numbers = #tpu.dot_dimension_numbers<[1], [0], [0], [1], [0, 0, 1, 1], [], []>} : vector<16x32xf32>, vector<32x32xf32>, vector<16x32xf32> -> vector<16x32xf32>
    %c0_64 = arith.constant 0 : index
    %c0_65 = arith.constant 0 : index
    %278 = vector.load %arg6[%c0_64, %c0_65] : memref<1x32xf32, #tpu.memory_space<vmem>>, vector<1x32xf32>
    %279 = vector.broadcast %278 : vector<1x32xf32> to vector<16x32xf32>
    %280 = arith.addf %277, %279 : vector<16x32xf32>
    %281 = math.tanh %280 : vector<16x32xf32>
    %c0_66 = arith.constant 0 : index
    %c0_67 = arith.constant 0 : index
    %282 = vector.load %arg7[%c0_66, %c0_67] : memref<32x16xf32, #tpu.memory_space<vmem>>, vector<32x16xf32>
    %cst_68 = arith.constant dense<0.000000e+00> : vector<16x16xf32>
    %283 = tpu.matmul %281, %282, %cst_68 {dimension_numbers = #tpu.dot_dimension_numbers<[1], [0], [0], [1], [0, 0, 1, 1], [], []>} : vector<16x32xf32>, vector<32x16xf32>, vector<16x16xf32> -> vector<16x16xf32>
    %c0_69 = arith.constant 0 : index
    %c0_70 = arith.constant 0 : index
    %284 = vector.load %arg8[%c0_69, %c0_70] : memref<1x16xf32, #tpu.memory_space<vmem>>, vector<1x16xf32>
    %285 = vector.broadcast %284 : vector<1x16xf32> to vector<16x16xf32>
    %286 = arith.addf %283, %285 : vector<16x16xf32>
    %287 = vector.extract_strided_slice %286 {offsets = [0, 0], sizes = [16, 8], strides = [1, 1]} : vector<16x16xf32> to vector<16x8xf32>
    %288 = vector.extract_strided_slice %286 {offsets = [0, 8], sizes = [16, 8], strides = [1, 1]} : vector<16x16xf32> to vector<16x8xf32>
    %289 = math.exp %288 : vector<16x8xf32>
    %c0_71 = arith.constant 0 : index
    %c0_72 = arith.constant 0 : index
    %290 = vector.load %arg9[%c0_71, %c0_72] : memref<16x8xf32, #tpu.memory_space<vmem>>, vector<16x8xf32>
    %291 = arith.mulf %289, %290 : vector<16x8xf32>
    %292 = arith.addf %287, %291 : vector<16x8xf32>
    %c0_73 = arith.constant 0 : index
    %c0_74 = arith.constant 0 : index
    %293 = vector.load %arg10[%c0_73, %c0_74] : memref<8x32xf32, #tpu.memory_space<vmem>>, vector<8x32xf32>
    %cst_75 = arith.constant dense<0.000000e+00> : vector<16x32xf32>
    %294 = tpu.matmul %292, %293, %cst_75 {dimension_numbers = #tpu.dot_dimension_numbers<[1], [0], [0], [1], [0, 0, 1, 1], [], []>} : vector<16x8xf32>, vector<8x32xf32>, vector<16x32xf32> -> vector<16x32xf32>
    %c0_76 = arith.constant 0 : index
    %c0_77 = arith.constant 0 : index
    %295 = vector.load %arg11[%c0_76, %c0_77] : memref<1x32xf32, #tpu.memory_space<vmem>>, vector<1x32xf32>
    %296 = vector.broadcast %295 : vector<1x32xf32> to vector<16x32xf32>
    %297 = arith.addf %294, %296 : vector<16x32xf32>
    %298 = math.tanh %297 : vector<16x32xf32>
    %c0_78 = arith.constant 0 : index
    %c0_79 = arith.constant 0 : index
    %299 = vector.load %arg12[%c0_78, %c0_79] : memref<32x40xf32, #tpu.memory_space<vmem>>, vector<32x40xf32>
    %cst_80 = arith.constant dense<0.000000e+00> : vector<16x40xf32>
    %300 = tpu.matmul %298, %299, %cst_80 {dimension_numbers = #tpu.dot_dimension_numbers<[1], [0], [0], [1], [0, 0, 1, 1], [], []>} : vector<16x32xf32>, vector<32x40xf32>, vector<16x40xf32> -> vector<16x40xf32>
    %c0_81 = arith.constant 0 : index
    %c0_82 = arith.constant 0 : index
    %301 = vector.load %arg13[%c0_81, %c0_82] : memref<1x40xf32, #tpu.memory_space<vmem>>, vector<1x40xf32>
    %302 = vector.broadcast %301 : vector<1x40xf32> to vector<16x40xf32>
    %303 = arith.addf %300, %302 : vector<16x40xf32>
    %c0_83 = arith.constant 0 : index
    %c0_84 = arith.constant 0 : index
    %304 = vector.load %arg14[%c0_83, %c0_84] : memref<16x40xf32, #tpu.memory_space<vmem>>, vector<16x40xf32>
    tpu.vector_store %arg14[%c0_83, %c0_84], %303 {strides = array<i32>} : memref<16x40xf32, #tpu.memory_space<vmem>>, vector<16x40xf32>,
    %c0_85 = arith.constant 0 : index
    %c0_86 = arith.constant 0 : index
    %305 = vector.load %arg15[%c0_85, %c0_86] : memref<16x8xf32, #tpu.memory_space<vmem>>, vector<16x8xf32>
    tpu.vector_store %arg15[%c0_85, %c0_86], %287 {strides = array<i32>} : memref<16x8xf32, #tpu.memory_space<vmem>>, vector<16x8xf32>,
    %c0_87 = arith.constant 0 : index
    %c0_88 = arith.constant 0 : index
    %306 = vector.load %arg16[%c0_87, %c0_88] : memref<16x8xf32, #tpu.memory_space<vmem>>, vector<16x8xf32>
    tpu.vector_store %arg16[%c0_87, %c0_88], %288 {strides = array<i32>} : memref<16x8xf32, #tpu.memory_space<vmem>>, vector<16x8xf32>,
    return
  }
}

</mosaic_0001>

<llo_original>
// kernel: tpu_custom_call.1
$region0: #{tpu_custom_call.1}
  #allocation0 [shape = 'u32[]', space=smem, size = 0x4, offset = 0x4, fixed_abs, tag = 'smem constant byte address 0x4 - core index']
  #allocation1 [shape = 'u32[144,128]{1,0:T(1,128)}', space=vmem, size = 0x12000, scoped, tag = 'internal scratch']
  #allocation2 [shape = 'f32[16,32]{1,0:T(8,128)}', space=vmem, size = 0x2000, scoped, tag = 'scratch operand']
  %s0 = inlined_call_operand.hbm [shape: f32[16,16], index: 0, kind: input, shape index: {}]
  %s1 = inlined_call_operand.hbm [shape: f32[16,96], index: 1, kind: input, shape index: {}]
  %s2 = inlined_call_operand.vmem [shape: f32[32,96], index: 2, kind: input, shape index: {}]
  %s3 = inlined_call_operand.vmem [shape: f32[1,96], index: 3, kind: input, shape index: {}]
  %s4 = inlined_call_operand.vmem [shape: f32[1,96], index: 4, kind: input, shape index: {}]
  %s5 = inlined_call_operand.vmem [shape: f32[32,32], index: 5, kind: input, shape index: {}]
  %s6 = inlined_call_operand.hbm [shape: f32[1,32], index: 6, kind: input, shape index: {}]
  %s7 = inlined_call_operand.vmem [shape: f32[32,16], index: 7, kind: input, shape index: {}]
  %s8 = inlined_call_operand.hbm [shape: f32[1,16], index: 8, kind: input, shape index: {}]
  %s9 = inlined_call_operand.vmem [shape: f32[16,8], index: 9, kind: input, shape index: {}]
  %s10 = inlined_call_operand.hbm [shape: f32[8,32], index: 10, kind: input, shape index: {}]
  %s11 = inlined_call_operand.vmem [shape: f32[1,32], index: 11, kind: input, shape index: {}]
  %s12 = inlined_call_operand.vmem [shape: f32[32,40], index: 12, kind: input, shape index: {}]
  %s13 = inlined_call_operand.vmem [shape: f32[1,40], index: 13, kind: input, shape index: {}]
  %s14 = inlined_call_operand.hbm [shape: f32[16,40], index: 14, kind: output, shape index: {0}]
  %s15 = inlined_call_operand.vmem [shape: f32[16,8], index: 15, kind: output, shape index: {1}]
  %s16 = inlined_call_operand.vmem [shape: f32[16,8], index: 16, kind: output, shape index: {2}]
  %17 = xla_tuple %s14, %s15, %s16
  %s18 = sld [smem:[#allocation0]]
  $region102: #{tpu_custom_call.1} parent=0
    _
  %s20 = ssub.s32 1, %s18
  %s21 = scalar_select 0, %s20, %s18
  $region1: #{tpu_custom_call.1} parent=0
    #allocation3 [shape = 'u8[8192]{0}', space=vmem, size = 0x2000, scoped, tag = 'input window, operand 0, single buffered']
    #allocation4 [shape = 's32[1]{0}', space=sflag, size = 0x4, scoped, tag = 'scoped memory for tpu_custom_call.1']
    #allocation5 [shape = 's32[1]{0}', space=sflag, size = 0x4, scoped, tag = 'scoped memory for tpu_custom_call.1']
    #allocation6 [shape = 'u8[8192]{0}', space=vmem, size = 0x2000, scoped, tag = 'input window, operand 1, single buffered']
    #allocation7 [shape = 's32[1]{0}', space=sflag, size = 0x4, scoped, tag = 'scoped memory for tpu_custom_call.1']
    #allocation8 [shape = 'u8[512]{0}', space=vmem, size = 0x400, scoped, tag = 'input window, operand 6, single buffered']
    #allocation9 [shape = 'u8[512]{0}', space=vmem, size = 0x400, scoped, tag = 'input window, operand 8, single buffered']
    #allocation10 [shape = 's32[1]{0}', space=sflag, size = 0x4, scoped, tag = 'scoped memory for tpu_custom_call.1']
    #allocation11 [shape = 'u8[4096]{0}', space=vmem, size = 0x1000, scoped, tag = 'input window, operand 10, single buffered']
    #allocation12 [shape = 'u8[8192]{0}', space=vmem, size = 0x2000, scoped, tag = 'output window, operand 0, single buffered']
    %22 = vsyncpa [#allocation4], 0
    %23 = vsyncpa [#allocation7], 0
    %24 = vsyncpa [#allocation10], 0
    %25 = vsyncpa [#allocation5], 0
    // Predicated region
    $region2: #{tpu_custom_call.1} parent=1 // pred_check
      _
    $region3: #{tpu_custom_call.1} parent=1 // pred_check_branch
      %27 = sbr.rel (0) target = $region5
    $region4: #{tpu_custom_call.1} parent=1 // pred_region
      %s29 = ssub.s32 256, 256
      %30 = vsyncadd [#allocation4], %s29
      %s31 = sshll.u32 [#allocation3], 4
      %s32 = int_to_ptr.vmem [resolvable:$true] %s31
      %37 = dma.hbm_to_vmem [thread:$0]  %s0, 256, %s32, [#allocation4], 128, 128, 8
    $region5: #{tpu_custom_call.1} parent=1 // pred_fallthru
      _
    // Predicated region
    $region6: #{tpu_custom_call.1} parent=1 // pred_check
      _
    $region7: #{tpu_custom_call.1} parent=1 // pred_check_branch
      %39 = sbr.rel (0) target = $region9
    $region8: #{tpu_custom_call.1} parent=1 // pred_region
      %s41 = ssub.s32 256, 256
      %42 = vsyncadd [#allocation7], %s41
      %s43 = sshll.u32 [#allocation6], 4
      %s44 = int_to_ptr.vmem [resolvable:$true] %s43
      %49 = dma.hbm_to_vmem [thread:$0]  %s1, 256, %s44, [#allocation7], 128, 128, 8
    $region9: #{tpu_custom_call.1} parent=1 // pred_fallthru
      _
    // Predicated region
    $region10: #{tpu_custom_call.1} parent=1 // pred_check
      _
    $region11: #{tpu_custom_call.1} parent=1 // pred_check_branch
      %51 = sbr.rel (0) target = $region13
    $region12: #{tpu_custom_call.1} parent=1 // pred_region
      _
    $region13: #{tpu_custom_call.1} parent=1 // pred_fallthru
      _
    // Predicated region
    $region14: #{tpu_custom_call.1} parent=1 // pred_check
      _
    $region15: #{tpu_custom_call.1} parent=1 // pred_check_branch
      %53 = sbr.rel (0) target = $region17
    $region16: #{tpu_custom_call.1} parent=1 // pred_region
      _
    $region17: #{tpu_custom_call.1} parent=1 // pred_fallthru
      _
    // Predicated region
    $region18: #{tpu_custom_call.1} parent=1 // pred_check
      _
    $region19: #{tpu_custom_call.1} parent=1 // pred_check_branch
      %55 = sbr.rel (0) target = $region21
    $region20: #{tpu_custom_call.1} parent=1 // pred_region
      _
    $region21: #{tpu_custom_call.1} parent=1 // pred_fallthru
      _
    // Predicated region
    $region22: #{tpu_custom_call.1} parent=1 // pred_check
      _
    $region23: #{tpu_custom_call.1} parent=1 // pred_check_branch
      %57 = sbr.rel (0) target = $region25
    $region24: #{tpu_custom_call.1} parent=1 // pred_region
      _
    $region25: #{tpu_custom_call.1} parent=1 // pred_fallthru
      _
    // Predicated region
    $region26: #{tpu_custom_call.1} parent=1 // pred_check
      _
    $region27: #{tpu_custom_call.1} parent=1 // pred_check_branch
      %59 = sbr.rel (0) target = $region29
    $region28: #{tpu_custom_call.1} parent=1 // pred_region
      %s61 = ssub.s32 16, 16
      %62 = vsyncadd [#allocation7], %s61
      %s64 = sshll.u32 [#allocation8], 4
      %s65 = int_to_ptr.vmem [resolvable:$true] %s64
      %67 = dma.hbm_to_vmem [thread:$0]  %s6, 16, %s65, [#allocation7]
    $region29: #{tpu_custom_call.1} parent=1 // pred_fallthru
      _
    // Predicated region
    $region30: #{tpu_custom_call.1} parent=1 // pred_check
      _
    $region31: #{tpu_custom_call.1} parent=1 // pred_check_branch
      %69 = sbr.rel (0) target = $region33
    $region32: #{tpu_custom_call.1} parent=1 // pred_region
      _
    $region33: #{tpu_custom_call.1} parent=1 // pred_fallthru
      _
    // Predicated region
    $region34: #{tpu_custom_call.1} parent=1 // pred_check
      _
    $region35: #{tpu_custom_call.1} parent=1 // pred_check_branch
      %71 = sbr.rel (0) target = $region37
    $region36: #{tpu_custom_call.1} parent=1 // pred_region
      %s73 = ssub.s32 16, 16
      %74 = vsyncadd [#allocation10], %s73
      %s76 = sshll.u32 [#allocation9], 4
      %s77 = int_to_ptr.vmem [resolvable:$true] %s76
      %79 = dma.hbm_to_vmem [thread:$0]  %s8, 16, %s77, [#allocation10]
    $region37: #{tpu_custom_call.1} parent=1 // pred_fallthru
      _
    // Predicated region
    $region38: #{tpu_custom_call.1} parent=1 // pred_check
      _
    $region39: #{tpu_custom_call.1} parent=1 // pred_check_branch
      %81 = sbr.rel (0) target = $region41
    $region40: #{tpu_custom_call.1} parent=1 // pred_region
      _
    $region41: #{tpu_custom_call.1} parent=1 // pred_fallthru
      _
    // Predicated region
    $region42: #{tpu_custom_call.1} parent=1 // pred_check
      _
    $region43: #{tpu_custom_call.1} parent=1 // pred_check_branch
      %83 = sbr.rel (0) target = $region45
    $region44: #{tpu_custom_call.1} parent=1 // pred_region
      %s85 = ssub.s32 128, 128
      %86 = vsyncadd [#allocation10], %s85
      %s88 = sshll.u32 [#allocation11], 4
      %s89 = int_to_ptr.vmem [resolvable:$true] %s88
      %91 = dma.hbm_to_vmem [thread:$0]  %s10, 128, %s89, [#allocation10]
    $region45: #{tpu_custom_call.1} parent=1 // pred_fallthru
      _
    // Predicated region
    $region46: #{tpu_custom_call.1} parent=1 // pred_check
      _
    $region47: #{tpu_custom_call.1} parent=1 // pred_check_branch
      %93 = sbr.rel (0) target = $region49
    $region48: #{tpu_custom_call.1} parent=1 // pred_region
      _
    $region49: #{tpu_custom_call.1} parent=1 // pred_fallthru
      _
    // Predicated region
    $region50: #{tpu_custom_call.1} parent=1 // pred_check
      _
    $region51: #{tpu_custom_call.1} parent=1 // pred_check_branch
      %95 = sbr.rel (0) target = $region53
    $region52: #{tpu_custom_call.1} parent=1 // pred_region
      _
    $region53: #{tpu_custom_call.1} parent=1 // pred_fallthru
      _
    // Predicated region
    $region54: #{tpu_custom_call.1} parent=1 // pred_check
      _
    $region55: #{tpu_custom_call.1} parent=1 // pred_check_branch
      %97 = sbr.rel (0) target = $region57
    $region56: #{tpu_custom_call.1} parent=1 // pred_region
      _
    $region57: #{tpu_custom_call.1} parent=1 // pred_fallthru
      _
    // Predicated region
    $region58: #{tpu_custom_call.1} parent=1 // pred_check
      _
    $region59: #{tpu_custom_call.1} parent=1 // pred_check_branch
      %99 = sbr.rel (0) target = $region61
    $region60: #{tpu_custom_call.1} parent=1 // pred_region
      %100 = dma.done [#allocation4], 256
    $region61: #{tpu_custom_call.1} parent=1 // pred_fallthru
      _
    // Predicated region
    $region62: #{tpu_custom_call.1} parent=1 // pred_check
      _
    $region63: #{tpu_custom_call.1} parent=1 // pred_check_branch
      %102 = sbr.rel (0) target = $region65
    $region64: #{tpu_custom_call.1} parent=1 // pred_region
      %103 = dma.done [#allocation7], 256
    $region65: #{tpu_custom_call.1} parent=1 // pred_fallthru
      _
    // Predicated region
    $region66: #{tpu_custom_call.1} parent=1 // pred_check
      _
    $region67: #{tpu_custom_call.1} parent=1 // pred_check_branch
      %105 = sbr.rel (0) target = $region69
    $region68: #{tpu_custom_call.1} parent=1 // pred_region
      %106 = dma.done [#allocation7], 16
    $region69: #{tpu_custom_call.1} parent=1 // pred_fallthru
      _
    // Predicated region
    $region70: #{tpu_custom_call.1} parent=1 // pred_check
      _
    $region71: #{tpu_custom_call.1} parent=1 // pred_check_branch
      %108 = sbr.rel (0) target = $region73
    $region72: #{tpu_custom_call.1} parent=1 // pred_region
      %109 = dma.done [#allocation10], 16
    $region73: #{tpu_custom_call.1} parent=1 // pred_fallthru
      _
    // Predicated region
    $region74: #{tpu_custom_call.1} parent=1 // pred_check
      _
    $region75: #{tpu_custom_call.1} parent=1 // pred_check_branch
      %111 = sbr.rel (0) target = $region77
    $region76: #{tpu_custom_call.1} parent=1 // pred_region
      %112 = dma.done [#allocation10], 128
    $region77: #{tpu_custom_call.1} parent=1 // pred_fallthru
      _
    %v113 = vld [vmem:[#allocation3] sm:$0xff]
    %v114 = vld [vmem:[#allocation3 + $0x8] sm:$0xff]
    %v115 = vld [vmem:[#allocation6] sm:$0xff]
    %v116 = vld [vmem:[#allocation6 + $0x8] sm:$0xff]
    %v117 = vld [vmem:[%s3] sm:$0x1]
    %v119 = vlaneseq
    %v120 = vshrl.u32 %v119, 7
    %v121 = vsub.s32 0, %v120
    %v122 = vrot.slane %v117, %v121
    %vm124 = vcmask 130048
    %v126 = vsel %vm124, %v113, 0
    %v129 = vsel %vm124, %v114, 0
    %131 = vmatprep.subr.mxu0 0.0
    %132 = vmatpush1.msra.mxu0 %v115
    %133 = vmatprep.subr.mxu0 0.0
    %134 = vmatpush1.msra.mxu0 %v116
    %135 = vmatprep.subr.mxu0 0.0
    %136 = vmatpush1.msra.mxu0 0.0
    %137 = vmatprep.subr.mxu0 0.0
    %138 = vmatpush1.msra.mxu0 0.0
    %139 = vmatprep.subr.mxu0 0.0
    %140 = vmatpush1.msra.mxu0 0.0
    %141 = vmatprep.subr.mxu0 0.0
    %142 = vmatpush1.msra.mxu0 0.0
    %143 = vmatprep.subr.mxu0 0.0
    %144 = vmatpush1.msra.mxu0 0.0
    %145 = vmatprep.subr.mxu0 0.0
    %146 = vmatpush1.msra.mxu0 0.0
    %147 = vmatprep.subr.mxu0 0.0
    %148 = vmatpush1.msra.mxu0 0.0
    %149 = vmatprep.subr.mxu0 0.0
    %150 = vmatpush1.msra.mxu0 0.0
    %151 = vmatprep.subr.mxu0 0.0
    %152 = vmatpush1.msra.mxu0 0.0
    %153 = vmatprep.subr.mxu0 0.0
    %154 = vmatpush1.msra.mxu0 0.0
    %155 = vmatprep.subr.mxu0 0.0
    %156 = vmatpush1.msra.mxu0 0.0
    %157 = vmatprep.subr.mxu0 0.0
    %158 = vmatpush1.msra.mxu0 0.0
    %159 = vmatprep.subr.mxu0 0.0
    %160 = vmatpush1.msra.mxu0 0.0
    %161 = vmatprep.subr.mxu0 0.0
    %162 = vmatpush1.msra.mxu0 0.0
    %163 = vmatprep.subr.mxu0 0.0
    %164 = vmatpush1.msra.mxu0 0.0
    %165 = vmatprep.subr.mxu0 0.0
    %166 = vmatpush1.msra.mxu0 0.0
    %167 = vmatprep.subr.mxu0 0.0
    %168 = vmatpush1.msra.mxu0 0.0
    %169 = vmatprep.subr.mxu0 0.0
    %170 = vmatpush1.msra.mxu0 0.0
    %171 = vmatprep.subr.mxu0 0.0
    %172 = vmatpush1.msra.mxu0 0.0
    %173 = vmatprep.subr.mxu0 0.0
    %174 = vmatpush1.msra.mxu0 0.0
    %175 = vmatprep.subr.mxu0 0.0
    %176 = vmatpush1.msra.mxu0 0.0
    %177 = vmatprep.subr.mxu0 0.0
    %178 = vmatpush1.msra.mxu0 0.0
    %179 = vmatprep.subr.mxu0 0.0
    %180 = vmatpush1.msra.mxu0 0.0
    %181 = vmatprep.subr.mxu0 0.0
    %182 = vmatpush1.msra.mxu0 0.0
    %183 = vmatprep.subr.mxu0 0.0
    %184 = vmatpush1.msra.mxu0 0.0
    %185 = vmatprep.subr.mxu0 0.0
    %186 = vmatpush1.msra.mxu0 0.0
    %187 = vmatprep.subr.mxu0 0.0
    %188 = vmatpush1.msra.mxu0 0.0
    %189 = vmatprep.subr.mxu0 0.0
    %190 = vmatpush1.msra.mxu0 0.0
    %191 = vmatprep.subr.mxu0 0.0
    %192 = vmatpush1.msra.mxu0 0.0
    %193 = vmatprep.subr.mxu0 0.0
    %194 = vmatpush1.msra.mxu0 0.0
    %195 = vmatprep.mubr.f32.mxu0 0.0
    %196 = vmatmul.mubr.f32.gmra.mrb[0].mxu0 %v126
    %v197 = vpop.f32.mrb[0].mxu0
    %v198 = vadd.f32 %v122, %v197
    %v199 = vpop.f32.mrb[0].mxu0
    %200 = vmatprep.mubr.f32.mxu0 0.0
    %201 = vmatmul.mubr.f32.gmra.mrb[0].mxu0 %v129
    %v202 = vpop.f32.mrb[0].mxu0
    %v203 = vadd.f32 %v122, %v202
    %v204 = vpop.f32.mrb[0].mxu0
    %205 = vdwg.mxu0
    %v206 = vld [vmem:[%s2] sm:$0xff]
    %v207 = vld [vmem:[%s2 + $0x8] sm:$0xff]
    %v208 = vld [vmem:[%s2 + $0x10] sm:$0xff]
    %v209 = vld [vmem:[%s2 + $0x18] sm:$0xff]
    %v210 = vld [vmem:[%s4] sm:$0x1]
    %v212 = vlaneseq
    %v213 = vshrl.u32 %v212, 7
    %v214 = vsub.s32 0, %v213
    %v215 = vrot.slane %v210, %v214
    %vm217 = vcmask 261120
    %v219 = vsel %vm217, 0.0, 0
    %221 = vmatprep.subr.mxu0 0.0
    %222 = vmatpush1.msra.mxu0 %v206
    %223 = vmatprep.subr.mxu0 0.0
    %224 = vmatpush1.msra.mxu0 %v207
    %225 = vmatprep.subr.mxu0 0.0
    %226 = vmatpush1.msra.mxu0 %v208
    %227 = vmatprep.subr.mxu0 0.0
    %228 = vmatpush1.msra.mxu0 %v209
    %229 = vmatprep.subr.mxu0 0.0
    %230 = vmatpush1.msra.mxu0 0.0
    %231 = vmatprep.subr.mxu0 0.0
    %232 = vmatpush1.msra.mxu0 0.0
    %233 = vmatprep.subr.mxu0 0.0
    %234 = vmatpush1.msra.mxu0 0.0
    %235 = vmatprep.subr.mxu0 0.0
    %236 = vmatpush1.msra.mxu0 0.0
    %237 = vmatprep.subr.mxu0 0.0
    %238 = vmatpush1.msra.mxu0 0.0
    %239 = vmatprep.subr.mxu0 0.0
    %240 = vmatpush1.msra.mxu0 0.0
    %241 = vmatprep.subr.mxu0 0.0
    %242 = vmatpush1.msra.mxu0 0.0
    %243 = vmatprep.subr.mxu0 0.0
    %244 = vmatpush1.msra.mxu0 0.0
    %245 = vmatprep.subr.mxu0 0.0
    %246 = vmatpush1.msra.mxu0 0.0
    %247 = vmatprep.subr.mxu0 0.0
    %248 = vmatpush1.msra.mxu0 0.0
    %249 = vmatprep.subr.mxu0 0.0
    %250 = vmatpush1.msra.mxu0 0.0
    %251 = vmatprep.subr.mxu0 0.0
    %252 = vmatpush1.msra.mxu0 0.0
    %253 = vmatprep.subr.mxu0 0.0
    %254 = vmatpush1.msra.mxu0 0.0
    %255 = vmatprep.subr.mxu0 0.0
    %256 = vmatpush1.msra.mxu0 0.0
    %257 = vmatprep.subr.mxu0 0.0
    %258 = vmatpush1.msra.mxu0 0.0
    %259 = vmatprep.subr.mxu0 0.0
    %260 = vmatpush1.msra.mxu0 0.0
    %261 = vmatprep.subr.mxu0 0.0
    %262 = vmatpush1.msra.mxu0 0.0
    %263 = vmatprep.subr.mxu0 0.0
    %264 = vmatpush1.msra.mxu0 0.0
    %265 = vmatprep.subr.mxu0 0.0
    %266 = vmatpush1.msra.mxu0 0.0
    %267 = vmatprep.subr.mxu0 0.0
    %268 = vmatpush1.msra.mxu0 0.0
    %269 = vmatprep.subr.mxu0 0.0
    %270 = vmatpush1.msra.mxu0 0.0
    %271 = vmatprep.subr.mxu0 0.0
    %272 = vmatpush1.msra.mxu0 0.0
    %273 = vmatprep.subr.mxu0 0.0
    %274 = vmatpush1.msra.mxu0 0.0
    %275 = vmatprep.subr.mxu0 0.0
    %276 = vmatpush1.msra.mxu0 0.0
    %277 = vmatprep.subr.mxu0 0.0
    %278 = vmatpush1.msra.mxu0 0.0
    %279 = vmatprep.subr.mxu0 0.0
    %280 = vmatpush1.msra.mxu0 0.0
    %281 = vmatprep.subr.mxu0 0.0
    %282 = vmatpush1.msra.mxu0 0.0
    %283 = vmatprep.subr.mxu0 0.0
    %284 = vmatpush1.msra.mxu0 0.0
    %285 = vmatprep.mubr.f32.mxu0 0.0
    %286 = vmatmul.mubr.f32.gmra.mrb[0].mxu0 %v219
    %v287 = vpop.f32.mrb[0].mxu0
    %v288 = vadd.f32 %v215, %v287
    %v289 = vpop.f32.mrb[0].mxu0
    %290 = vdwg.mxu0
    %v291 = vadd.f32 %v198, %v288
    %v292 = vxor.u32 %v291, 2147483648
    %v293 = vmul.f32 %v292, 1.442695
    %v294 = vpow.pop %v293
    %v295 = vadd.f32 %v294, 1.0
    %v296 = vrcp.pop %v295
    %v297 = vmul.f32 1.0, %v296
    %299 = vrot.lane.b32.xlu0 %v288, 64
    %v300 = vpop.permute.xlu0 %299
    %v302 = vmul.f32 %v297, %v300
    %304 = vrot.lane.b32.xlu0 %v302, 64
    %v305 = vpop.permute.xlu0 %304
    %v307 = vadd.f32 %v198, %v305
    %v308 = vtanh.pop %v307
    %v309 = vsub.f32 1.0, %v297
    %311 = vrot.lane.b32.xlu0 %v308, 96
    %v312 = vpop.permute.xlu0 %311
    %v314 = vmul.f32 %v309, %v312
    %v315 = vmul.f32 %v297, 0.0
    %v316 = vadd.f32 %v314, %v315
    %318 = vrot.lane.b32.xlu0 %v316, 96
    %v319 = vpop.permute.xlu0 %318
    %vm321 = vcmask 253952
    %322 = vst.msk [vmem:[#allocation2] sm:$0x1] %vm321, %v319
    %vm323 = vcmask 254977
    %324 = vst.msk [vmem:[#allocation2 + $0x7] sm:$0x2] %vm323, %v319
    %v325 = vsel %vm217, %v319, 0
    %327 = vmatprep.subr.mxu0 0.0
    %328 = vmatpush1.msra.mxu0 %v206
    %329 = vmatprep.subr.mxu0 0.0
    %330 = vmatpush1.msra.mxu0 %v207
    %331 = vmatprep.subr.mxu0 0.0
    %332 = vmatpush1.msra.mxu0 %v208
    %333 = vmatprep.subr.mxu0 0.0
    %334 = vmatpush1.msra.mxu0 %v209
    %335 = vmatprep.subr.mxu0 0.0
    %336 = vmatpush1.msra.mxu0 0.0
    %337 = vmatprep.subr.mxu0 0.0
    %338 = vmatpush1.msra.mxu0 0.0
    %339 = vmatprep.subr.mxu0 0.0
    %340 = vmatpush1.msra.mxu0 0.0
    %341 = vmatprep.subr.mxu0 0.0
    %342 = vmatpush1.msra.mxu0 0.0
    %343 = vmatprep.subr.mxu0 0.0
    %344 = vmatpush1.msra.mxu0 0.0
    %345 = vmatprep.subr.mxu0 0.0
    %346 = vmatpush1.msra.mxu0 0.0
    %347 = vmatprep.subr.mxu0 0.0
    %348 = vmatpush1.msra.mxu0 0.0
    %349 = vmatprep.subr.mxu0 0.0
    %350 = vmatpush1.msra.mxu0 0.0
    %351 = vmatprep.subr.mxu0 0.0
    %352 = vmatpush1.msra.mxu0 0.0
    %353 = vmatprep.subr.mxu0 0.0
    %354 = vmatpush1.msra.mxu0 0.0
    %355 = vmatprep.subr.mxu0 0.0
    %356 = vmatpush1.msra.mxu0 0.0
    %357 = vmatprep.subr.mxu0 0.0
    %358 = vmatpush1.msra.mxu0 0.0
    %359 = vmatprep.subr.mxu0 0.0
    %360 = vmatpush1.msra.mxu0 0.0
    %361 = vmatprep.subr.mxu0 0.0
    %362 = vmatpush1.msra.mxu0 0.0
    %363 = vmatprep.subr.mxu0 0.0
    %364 = vmatpush1.msra.mxu0 0.0
    %365 = vmatprep.subr.mxu0 0.0
    %366 = vmatpush1.msra.mxu0 0.0
    %367 = vmatprep.subr.mxu0 0.0
    %368 = vmatpush1.msra.mxu0 0.0
    %369 = vmatprep.subr.mxu0 0.0
    %370 = vmatpush1.msra.mxu0 0.0
    %371 = vmatprep.subr.mxu0 0.0
    %372 = vmatpush1.msra.mxu0 0.0
    %373 = vmatprep.subr.mxu0 0.0
    %374 = vmatpush1.msra.mxu0 0.0
    %375 = vmatprep.subr.mxu0 0.0
    %376 = vmatpush1.msra.mxu0 0.0
    %377 = vmatprep.subr.mxu0 0.0
    %378 = vmatpush1.msra.mxu0 0.0
    %379 = vmatprep.subr.mxu0 0.0
    %380 = vmatpush1.msra.mxu0 0.0
    %381 = vmatprep.subr.mxu0 0.0
    %382 = vmatpush1.msra.mxu0 0.0
    %383 = vmatprep.subr.mxu0 0.0
    %384 = vmatpush1.msra.mxu0 0.0
    %385 = vmatprep.subr.mxu0 0.0
    %386 = vmatpush1.msra.mxu0 0.0
    %387 = vmatprep.subr.mxu0 0.0
    %388 = vmatpush1.msra.mxu0 0.0
    %389 = vmatprep.subr.mxu0 0.0
    %390 = vmatpush1.msra.mxu0 0.0
    %391 = vmatprep.mubr.f32.mxu0 0.0
    %392 = vmatmul.mubr.f32.gmra.mrb[0].mxu0 %v325
    %v393 = vpop.f32.mrb[0].mxu0
    %v394 = vadd.f32 %v215, %v393
    %v395 = vpop.f32.mrb[0].mxu0
    %396 = vdwg.mxu0
    %v398 = vrot.slane %v394, 6
    %v400 = vadd.f32 %v198, %v398
    %v401 = vxor.u32 %v400, 2147483648
    %v402 = vmul.f32 %v401, 1.442695
    %v403 = vpow.pop %v402
    %v404 = vadd.f32 %v403, 1.0
    %v405 = vrcp.pop %v404
    %v406 = vmul.f32 1.0, %v405
    %407 = vrot.lane.b32.xlu0 %v398, 64
    %v408 = vpop.permute.xlu0 %407
    %v410 = vmul.f32 %v406, %v408
    %412 = vrot.lane.b32.xlu0 %v410, 64
    %v413 = vpop.permute.xlu0 %412
    %v415 = vadd.f32 %v198, %v413
    %v416 = vtanh.pop %v415
    %v417 = vsub.f32 1.0, %v406
    %419 = vrot.lane.b32.xlu0 %v416, 96
    %v420 = vpop.permute.xlu0 %419
    %v422 = vmul.f32 %v417, %v420
    %v423 = vrot.slane %v316, 6
    %v425 = vmul.f32 %v406, %v423
    %v426 = vadd.f32 %v422, %v425
    %428 = vrot.lane.b32.xlu0 %v426, 96
    %v429 = vpop.permute.xlu0 %428
    %vm431 = vcmask 256002
    %432 = vst.msk [vmem:[#allocation2 - $0x1] sm:$0x4] %vm431, %v429
    %vm433 = vcmask 257027
    %434 = vst.msk [vmem:[#allocation2 + $0x6] sm:$0x8] %vm433, %v429
    %v435 = vrot.slane %v426, 2
    %436 = vrot.lane.b32.xlu0 %v435, 96
    %v437 = vpop.permute.xlu0 %436
    %v438 = vsel %vm217, %v437, 0
    %440 = vmatprep.subr.mxu0 0.0
    %441 = vmatpush1.msra.mxu0 %v206
    %442 = vmatprep.subr.mxu0 0.0
    %443 = vmatpush1.msra.mxu0 %v207
    %444 = vmatprep.subr.mxu0 0.0
    %445 = vmatpush1.msra.mxu0 %v208
    %446 = vmatprep.subr.mxu0 0.0
    %447 = vmatpush1.msra.mxu0 %v209
    %448 = vmatprep.subr.mxu0 0.0
    %449 = vmatpush1.msra.mxu0 0.0
    %450 = vmatprep.subr.mxu0 0.0
    %451 = vmatpush1.msra.mxu0 0.0
    %452 = vmatprep.subr.mxu0 0.0
    %453 = vmatpush1.msra.mxu0 0.0
    %454 = vmatprep.subr.mxu0 0.0
    %455 = vmatpush1.msra.mxu0 0.0
    %456 = vmatprep.subr.mxu0 0.0
    %457 = vmatpush1.msra.mxu0 0.0
    %458 = vmatprep.subr.mxu0 0.0
    %459 = vmatpush1.msra.mxu0 0.0
    %460 = vmatprep.subr.mxu0 0.0
    %461 = vmatpush1.msra.mxu0 0.0
    %462 = vmatprep.subr.mxu0 0.0
    %463 = vmatpush1.msra.mxu0 0.0
    %464 = vmatprep.subr.mxu0 0.0
    %465 = vmatpush1.msra.mxu0 0.0
    %466 = vmatprep.subr.mxu0 0.0
    %467 = vmatpush1.msra.mxu0 0.0
    %468 = vmatprep.subr.mxu0 0.0
    %469 = vmatpush1.msra.mxu0 0.0
    %470 = vmatprep.subr.mxu0 0.0
    %471 = vmatpush1.msra.mxu0 0.0
    %472 = vmatprep.subr.mxu0 0.0
    %473 = vmatpush1.msra.mxu0 0.0
    %474 = vmatprep.subr.mxu0 0.0
    %475 = vmatpush1.msra.mxu0 0.0
    %476 = vmatprep.subr.mxu0 0.0
    %477 = vmatpush1.msra.mxu0 0.0
    %478 = vmatprep.subr.mxu0 0.0
    %479 = vmatpush1.msra.mxu0 0.0
    %480 = vmatprep.subr.mxu0 0.0
    %481 = vmatpush1.msra.mxu0 0.0
    %482 = vmatprep.subr.mxu0 0.0
    %483 = vmatpush1.msra.mxu0 0.0
    %484 = vmatprep.subr.mxu0 0.0
    %485 = vmatpush1.msra.mxu0 0.0
    %486 = vmatprep.subr.mxu0 0.0
    %487 = vmatpush1.msra.mxu0 0.0
    %488 = vmatprep.subr.mxu0 0.0
    %489 = vmatpush1.msra.mxu0 0.0
    %490 = vmatprep.subr.mxu0 0.0
    %491 = vmatpush1.msra.mxu0 0.0
    %492 = vmatprep.subr.mxu0 0.0
    %493 = vmatpush1.msra.mxu0 0.0
    %494 = vmatprep.subr.mxu0 0.0
    %495 = vmatpush1.msra.mxu0 0.0
    %496 = vmatprep.subr.mxu0 0.0
    %497 = vmatpush1.msra.mxu0 0.0
    %498 = vmatprep.subr.mxu0 0.0
    %499 = vmatpush1.msra.mxu0 0.0
    %500 = vmatprep.subr.mxu0 0.0
    %501 = vmatpush1.msra.mxu0 0.0
    %502 = vmatprep.subr.mxu0 0.0
    %503 = vmatpush1.msra.mxu0 0.0
    %504 = vmatprep.mubr.f32.mxu0 0.0
    %505 = vmatmul.mubr.f32.gmra.mrb[0].mxu0 %v438
    %v506 = vpop.f32.mrb[0].mxu0
    %v507 = vadd.f32 %v215, %v506
    %v508 = vpop.f32.mrb[0].mxu0
    %509 = vdwg.mxu0
    %v511 = vrot.slane %v507, 4
    %v513 = vadd.f32 %v198, %v511
    %v514 = vxor.u32 %v513, 2147483648
    %v515 = vmul.f32 %v514, 1.442695
    %v516 = vpow.pop %v515
    %v517 = vadd.f32 %v516, 1.0
    %v518 = vrcp.pop %v517
    %v519 = vmul.f32 1.0, %v518
    %520 = vrot.lane.b32.xlu0 %v511, 64
    %v521 = vpop.permute.xlu0 %520
    %v523 = vmul.f32 %v519, %v521
    %525 = vrot.lane.b32.xlu0 %v523, 64
    %v526 = vpop.permute.xlu0 %525
    %v528 = vadd.f32 %v198, %v526
    %v529 = vtanh.pop %v528
    %v530 = vsub.f32 1.0, %v519
    %532 = vrot.lane.b32.xlu0 %v529, 96
    %v533 = vpop.permute.xlu0 %532
    %v535 = vmul.f32 %v530, %v533
    %v536 = vrot.slane %v426, 6
    %v538 = vmul.f32 %v519, %v536
    %v539 = vadd.f32 %v535, %v538
    %541 = vrot.lane.b32.xlu0 %v539, 96
    %v542 = vpop.permute.xlu0 %541
    %vm544 = vcmask 258052
    %545 = vst.msk [vmem:[#allocation2 - $0x2] sm:$0x10] %vm544, %v542
    %vm546 = vcmask 259077
    %547 = vst.msk [vmem:[#allocation2 + $0x5] sm:$0x20] %vm546, %v542
    %v548 = vrot.slane %v539, 4
    %549 = vrot.lane.b32.xlu0 %v548, 96
    %v550 = vpop.permute.xlu0 %549
    %v551 = vsel %vm217, %v550, 0
    %553 = vmatprep.subr.mxu0 0.0
    %554 = vmatpush1.msra.mxu0 %v206
    %555 = vmatprep.subr.mxu0 0.0
    %556 = vmatpush1.msra.mxu0 %v207
    %557 = vmatprep.subr.mxu0 0.0
    %558 = vmatpush1.msra.mxu0 %v208
    %559 = vmatprep.subr.mxu0 0.0
    %560 = vmatpush1.msra.mxu0 %v209
    %561 = vmatprep.subr.mxu0 0.0
    %562 = vmatpush1.msra.mxu0 0.0
    %563 = vmatprep.subr.mxu0 0.0
    %564 = vmatpush1.msra.mxu0 0.0
    %565 = vmatprep.subr.mxu0 0.0
    %566 = vmatpush1.msra.mxu0 0.0
    %567 = vmatprep.subr.mxu0 0.0
    %568 = vmatpush1.msra.mxu0 0.0
    %569 = vmatprep.subr.mxu0 0.0
    %570 = vmatpush1.msra.mxu0 0.0
    %571 = vmatprep.subr.mxu0 0.0
    %572 = vmatpush1.msra.mxu0 0.0
    %573 = vmatprep.subr.mxu0 0.0
    %574 = vmatpush1.msra.mxu0 0.0
    %575 = vmatprep.subr.mxu0 0.0
    %576 = vmatpush1.msra.mxu0 0.0
    %577 = vmatprep.subr.mxu0 0.0
    %578 = vmatpush1.msra.mxu0 0.0
    %579 = vmatprep.subr.mxu0 0.0
    %580 = vmatpush1.msra.mxu0 0.0
    %581 = vmatprep.subr.mxu0 0.0
    %582 = vmatpush1.msra.mxu0 0.0
    %583 = vmatprep.subr.mxu0 0.0
    %584 = vmatpush1.msra.mxu0 0.0
    %585 = vmatprep.subr.mxu0 0.0
    %586 = vmatpush1.msra.mxu0 0.0
    %587 = vmatprep.subr.mxu0 0.0
    %588 = vmatpush1.msra.mxu0 0.0
    %589 = vmatprep.subr.mxu0 0.0
    %590 = vmatpush1.msra.mxu0 0.0
    %591 = vmatprep.subr.mxu0 0.0
    %592 = vmatpush1.msra.mxu0 0.0
    %593 = vmatprep.subr.mxu0 0.0
    %594 = vmatpush1.msra.mxu0 0.0
    %595 = vmatprep.subr.mxu0 0.0
    %596 = vmatpush1.msra.mxu0 0.0
    %597 = vmatprep.subr.mxu0 0.0
    %598 = vmatpush1.msra.mxu0 0.0
    %599 = vmatprep.subr.mxu0 0.0
    %600 = vmatpush1.msra.mxu0 0.0
    %601 = vmatprep.subr.mxu0 0.0
    %602 = vmatpush1.msra.mxu0 0.0
    %603 = vmatprep.subr.mxu0 0.0
    %604 = vmatpush1.msra.mxu0 0.0
    %605 = vmatprep.subr.mxu0 0.0
    %606 = vmatpush1.msra.mxu0 0.0
    %607 = vmatprep.subr.mxu0 0.0
    %608 = vmatpush1.msra.mxu0 0.0
    %609 = vmatprep.subr.mxu0 0.0
    %610 = vmatpush1.msra.mxu0 0.0
    %611 = vmatprep.subr.mxu0 0.0
    %612 = vmatpush1.msra.mxu0 0.0
    %613 = vmatprep.subr.mxu0 0.0
    %614 = vmatpush1.msra.mxu0 0.0
    %615 = vmatprep.subr.mxu0 0.0
    %616 = vmatpush1.msra.mxu0 0.0
    %617 = vmatprep.mubr.f32.mxu0 0.0
    %618 = vmatmul.mubr.f32.gmra.mrb[0].mxu0 %v551
    %v619 = vpop.f32.mrb[0].mxu0
    %v620 = vadd.f32 %v215, %v619
    %v621 = vpop.f32.mrb[0].mxu0
    %622 = vdwg.mxu0
    %v624 = vrot.slane %v620, 2
    %v626 = vadd.f32 %v198, %v624
    %v627 = vxor.u32 %v626, 2147483648
    %v628 = vmul.f32 %v627, 1.442695
    %v629 = vpow.pop %v628
    %v630 = vadd.f32 %v629, 1.0
    %v631 = vrcp.pop %v630
    %v632 = vmul.f32 1.0, %v631
    %633 = vrot.lane.b32.xlu0 %v624, 64
    %v634 = vpop.permute.xlu0 %633
    %v636 = vmul.f32 %v632, %v634
    %638 = vrot.lane.b32.xlu0 %v636, 64
    %v639 = vpop.permute.xlu0 %638
    %v641 = vadd.f32 %v198, %v639
    %v642 = vtanh.pop %v641
    %v643 = vsub.f32 1.0, %v632
    %645 = vrot.lane.b32.xlu0 %v642, 96
    %v646 = vpop.permute.xlu0 %645
    %v648 = vmul.f32 %v643, %v646
    %v649 = vrot.slane %v539, 6
    %v651 = vmul.f32 %v632, %v649
    %v652 = vadd.f32 %v648, %v651
    %654 = vrot.lane.b32.xlu0 %v652, 96
    %v655 = vpop.permute.xlu0 %654
    %vm657 = vcmask 260102
    %658 = vst.msk [vmem:[#allocation2 - $0x3] sm:$0x40] %vm657, %v655
    %vm659 = vcmask 261127
    %660 = vst.msk [vmem:[#allocation2 + $0x4] sm:$0x80] %vm659, %v655
    %v661 = vrot.slane %v652, 6
    %662 = vrot.lane.b32.xlu0 %v661, 96
    %v663 = vpop.permute.xlu0 %662
    %v664 = vsel %vm217, %v663, 0
    %666 = vmatprep.subr.mxu0 0.0
    %667 = vmatpush1.msra.mxu0 %v206
    %668 = vmatprep.subr.mxu0 0.0
    %669 = vmatpush1.msra.mxu0 %v207
    %670 = vmatprep.subr.mxu0 0.0
    %671 = vmatpush1.msra.mxu0 %v208
    %672 = vmatprep.subr.mxu0 0.0
    %673 = vmatpush1.msra.mxu0 %v209
    %674 = vmatprep.subr.mxu0 0.0
    %675 = vmatpush1.msra.mxu0 0.0
    %676 = vmatprep.subr.mxu0 0.0
    %677 = vmatpush1.msra.mxu0 0.0
    %678 = vmatprep.subr.mxu0 0.0
    %679 = vmatpush1.msra.mxu0 0.0
    %680 = vmatprep.subr.mxu0 0.0
    %681 = vmatpush1.msra.mxu0 0.0
    %682 = vmatprep.subr.mxu0 0.0
    %683 = vmatpush1.msra.mxu0 0.0
    %684 = vmatprep.subr.mxu0 0.0
    %685 = vmatpush1.msra.mxu0 0.0
    %686 = vmatprep.subr.mxu0 0.0
    %687 = vmatpush1.msra.mxu0 0.0
    %688 = vmatprep.subr.mxu0 0.0
    %689 = vmatpush1.msra.mxu0 0.0
    %690 = vmatprep.subr.mxu0 0.0
    %691 = vmatpush1.msra.mxu0 0.0
    %692 = vmatprep.subr.mxu0 0.0
    %693 = vmatpush1.msra.mxu0 0.0
    %694 = vmatprep.subr.mxu0 0.0
    %695 = vmatpush1.msra.mxu0 0.0
    %696 = vmatprep.subr.mxu0 0.0
    %697 = vmatpush1.msra.mxu0 0.0
    %698 = vmatprep.subr.mxu0 0.0
    %699 = vmatpush1.msra.mxu0 0.0
    %700 = vmatprep.subr.mxu0 0.0
    %701 = vmatpush1.msra.mxu0 0.0
    %702 = vmatprep.subr.mxu0 0.0
    %703 = vmatpush1.msra.mxu0 0.0
    %704 = vmatprep.subr.mxu0 0.0
    %705 = vmatpush1.msra.mxu0 0.0
    %706 = vmatprep.subr.mxu0 0.0
    %707 = vmatpush1.msra.mxu0 0.0
    %708 = vmatprep.subr.mxu0 0.0
    %709 = vmatpush1.msra.mxu0 0.0
    %710 = vmatprep.subr.mxu0 0.0
    %711 = vmatpush1.msra.mxu0 0.0
    %712 = vmatprep.subr.mxu0 0.0
    %713 = vmatpush1.msra.mxu0 0.0
    %714 = vmatprep.subr.mxu0 0.0
    %715 = vmatpush1.msra.mxu0 0.0
    %716 = vmatprep.subr.mxu0 0.0
    %717 = vmatpush1.msra.mxu0 0.0
    %718 = vmatprep.subr.mxu0 0.0
    %719 = vmatpush1.msra.mxu0 0.0
    %720 = vmatprep.subr.mxu0 0.0
    %721 = vmatpush1.msra.mxu0 0.0
    %722 = vmatprep.subr.mxu0 0.0
    %723 = vmatpush1.msra.mxu0 0.0
    %724 = vmatprep.subr.mxu0 0.0
    %725 = vmatpush1.msra.mxu0 0.0
    %726 = vmatprep.subr.mxu0 0.0
    %727 = vmatpush1.msra.mxu0 0.0
    %728 = vmatprep.subr.mxu0 0.0
    %729 = vmatpush1.msra.mxu0 0.0
    %730 = vmatprep.mubr.f32.mxu0 0.0
    %731 = vmatmul.mubr.f32.gmra.mrb[0].mxu0 %v664
    %v732 = vpop.f32.mrb[0].mxu0
    %v733 = vadd.f32 %v215, %v732
    %v734 = vpop.f32.mrb[0].mxu0
    %735 = vdwg.mxu0
    %v736 = vadd.f32 %v203, %v733
    %v737 = vxor.u32 %v736, 2147483648
    %v738 = vmul.f32 %v737, 1.442695
    %v739 = vpow.pop %v738
    %v740 = vadd.f32 %v739, 1.0
    %v741 = vrcp.pop %v740
    %v742 = vmul.f32 1.0, %v741
    %744 = vrot.lane.b32.xlu0 %v733, 64
    %v745 = vpop.permute.xlu0 %744
    %v747 = vmul.f32 %v742, %v745
    %749 = vrot.lane.b32.xlu0 %v747, 64
    %v750 = vpop.permute.xlu0 %749
    %v752 = vadd.f32 %v203, %v750
    %v753 = vtanh.pop %v752
    %v754 = vsub.f32 1.0, %v742
    %756 = vrot.lane.b32.xlu0 %v753, 96
    %v757 = vpop.permute.xlu0 %756
    %v759 = vmul.f32 %v754, %v757
    %v761 = vmul.f32 %v742, %v661
    %v762 = vadd.f32 %v759, %v761
    %764 = vrot.lane.b32.xlu0 %v762, 96
    %v765 = vpop.permute.xlu0 %764
    %767 = vst.msk [vmem:[#allocation2 + $0x4] sm:$0x1] %vm321, %v765
    %768 = vst.msk [vmem:[#allocation2 + $0xb] sm:$0x2] %vm323, %v765
    %v769 = vsel %vm217, %v765, 0
    %771 = vmatprep.subr.mxu0 0.0
    %772 = vmatpush1.msra.mxu0 %v206
    %773 = vmatprep.subr.mxu0 0.0
    %774 = vmatpush1.msra.mxu0 %v207
    %775 = vmatprep.subr.mxu0 0.0
    %776 = vmatpush1.msra.mxu0 %v208
    %777 = vmatprep.subr.mxu0 0.0
    %778 = vmatpush1.msra.mxu0 %v209
    %779 = vmatprep.subr.mxu0 0.0
    %780 = vmatpush1.msra.mxu0 0.0
    %781 = vmatprep.subr.mxu0 0.0
    %782 = vmatpush1.msra.mxu0 0.0
    %783 = vmatprep.subr.mxu0 0.0
    %784 = vmatpush1.msra.mxu0 0.0
    %785 = vmatprep.subr.mxu0 0.0
    %786 = vmatpush1.msra.mxu0 0.0
    %787 = vmatprep.subr.mxu0 0.0
    %788 = vmatpush1.msra.mxu0 0.0
    %789 = vmatprep.subr.mxu0 0.0
    %790 = vmatpush1.msra.mxu0 0.0
    %791 = vmatprep.subr.mxu0 0.0
    %792 = vmatpush1.msra.mxu0 0.0
    %793 = vmatprep.subr.mxu0 0.0
    %794 = vmatpush1.msra.mxu0 0.0
    %795 = vmatprep.subr.mxu0 0.0
    %796 = vmatpush1.msra.mxu0 0.0
    %797 = vmatprep.subr.mxu0 0.0
    %798 = vmatpush1.msra.mxu0 0.0
    %799 = vmatprep.subr.mxu0 0.0
    %800 = vmatpush1.msra.mxu0 0.0
    %801 = vmatprep.subr.mxu0 0.0
    %802 = vmatpush1.msra.mxu0 0.0
    %803 = vmatprep.subr.mxu0 0.0
    %804 = vmatpush1.msra.mxu0 0.0
    %805 = vmatprep.subr.mxu0 0.0
    %806 = vmatpush1.msra.mxu0 0.0
    %807 = vmatprep.subr.mxu0 0.0
    %808 = vmatpush1.msra.mxu0 0.0
    %809 = vmatprep.subr.mxu0 0.0
    %810 = vmatpush1.msra.mxu0 0.0
    %811 = vmatprep.subr.mxu0 0.0
    %812 = vmatpush1.msra.mxu0 0.0
    %813 = vmatprep.subr.mxu0 0.0
    %814 = vmatpush1.msra.mxu0 0.0
    %815 = vmatprep.subr.mxu0 0.0
    %816 = vmatpush1.msra.mxu0 0.0
    %817 = vmatprep.subr.mxu0 0.0
    %818 = vmatpush1.msra.mxu0 0.0
    %819 = vmatprep.subr.mxu0 0.0
    %820 = vmatpush1.msra.mxu0 0.0
    %821 = vmatprep.subr.mxu0 0.0
    %822 = vmatpush1.msra.mxu0 0.0
    %823 = vmatprep.subr.mxu0 0.0
    %824 = vmatpush1.msra.mxu0 0.0
    %825 = vmatprep.subr.mxu0 0.0
    %826 = vmatpush1.msra.mxu0 0.0
    %827 = vmatprep.subr.mxu0 0.0
    %828 = vmatpush1.msra.mxu0 0.0
    %829 = vmatprep.subr.mxu0 0.0
    %830 = vmatpush1.msra.mxu0 0.0
    %831 = vmatprep.subr.mxu0 0.0
    %832 = vmatpush1.msra.mxu0 0.0
    %833 = vmatprep.subr.mxu0 0.0
    %834 = vmatpush1.msra.mxu0 0.0
    %835 = vmatprep.mubr.f32.mxu0 0.0
    %836 = vmatmul.mubr.f32.gmra.mrb[0].mxu0 %v769
    %v837 = vpop.f32.mrb[0].mxu0
    %v838 = vadd.f32 %v215, %v837
    %v839 = vpop.f32.mrb[0].mxu0
    %840 = vdwg.mxu0
    %v842 = vrot.slane %v838, 6
    %v844 = vadd.f32 %v203, %v842
    %v845 = vxor.u32 %v844, 2147483648
    %v846 = vmul.f32 %v845, 1.442695
    %v847 = vpow.pop %v846
    %v848 = vadd.f32 %v847, 1.0
    %v849 = vrcp.pop %v848
    %v850 = vmul.f32 1.0, %v849
    %851 = vrot.lane.b32.xlu0 %v842, 64
    %v852 = vpop.permute.xlu0 %851
    %v854 = vmul.f32 %v850, %v852
    %856 = vrot.lane.b32.xlu0 %v854, 64
    %v857 = vpop.permute.xlu0 %856
    %v859 = vadd.f32 %v203, %v857
    %v860 = vtanh.pop %v859
    %v861 = vsub.f32 1.0, %v850
    %863 = vrot.lane.b32.xlu0 %v860, 96
    %v864 = vpop.permute.xlu0 %863
    %v866 = vmul.f32 %v861, %v864
    %v867 = vrot.slane %v762, 6
    %v869 = vmul.f32 %v850, %v867
    %v870 = vadd.f32 %v866, %v869
    %872 = vrot.lane.b32.xlu0 %v870, 96
    %v873 = vpop.permute.xlu0 %872
    %875 = vst.msk [vmem:[#allocation2 + $0x3] sm:$0x4] %vm431, %v873
    %876 = vst.msk [vmem:[#allocation2 + $0xa] sm:$0x8] %vm433, %v873
    %v877 = vrot.slane %v870, 2
    %878 = vrot.lane.b32.xlu0 %v877, 96
    %v879 = vpop.permute.xlu0 %878
    %v880 = vsel %vm217, %v879, 0
    %882 = vmatprep.subr.mxu0 0.0
    %883 = vmatpush1.msra.mxu0 %v206
    %884 = vmatprep.subr.mxu0 0.0
    %885 = vmatpush1.msra.mxu0 %v207
    %886 = vmatprep.subr.mxu0 0.0
    %887 = vmatpush1.msra.mxu0 %v208
    %888 = vmatprep.subr.mxu0 0.0
    %889 = vmatpush1.msra.mxu0 %v209
    %890 = vmatprep.subr.mxu0 0.0
    %891 = vmatpush1.msra.mxu0 0.0
    %892 = vmatprep.subr.mxu0 0.0
    %893 = vmatpush1.msra.mxu0 0.0
    %894 = vmatprep.subr.mxu0 0.0
    %895 = vmatpush1.msra.mxu0 0.0
    %896 = vmatprep.subr.mxu0 0.0
    %897 = vmatpush1.msra.mxu0 0.0
    %898 = vmatprep.subr.mxu0 0.0
    %899 = vmatpush1.msra.mxu0 0.0
    %900 = vmatprep.subr.mxu0 0.0
    %901 = vmatpush1.msra.mxu0 0.0
    %902 = vmatprep.subr.mxu0 0.0
    %903 = vmatpush1.msra.mxu0 0.0
    %904 = vmatprep.subr.mxu0 0.0
    %905 = vmatpush1.msra.mxu0 0.0
    %906 = vmatprep.subr.mxu0 0.0
    %907 = vmatpush1.msra.mxu0 0.0
    %908 = vmatprep.subr.mxu0 0.0
    %909 = vmatpush1.msra.mxu0 0.0
    %910 = vmatprep.subr.mxu0 0.0
    %911 = vmatpush1.msra.mxu0 0.0
    %912 = vmatprep.subr.mxu0 0.0
    %913 = vmatpush1.msra.mxu0 0.0
    %914 = vmatprep.subr.mxu0 0.0
    %915 = vmatpush1.msra.mxu0 0.0
    %916 = vmatprep.subr.mxu0 0.0
    %917 = vmatpush1.msra.mxu0 0.0
    %918 = vmatprep.subr.mxu0 0.0
    %919 = vmatpush1.msra.mxu0 0.0
    %920 = vmatprep.subr.mxu0 0.0
    %921 = vmatpush1.msra.mxu0 0.0
    %922 = vmatprep.subr.mxu0 0.0
    %923 = vmatpush1.msra.mxu0 0.0
    %924 = vmatprep.subr.mxu0 0.0
    %925 = vmatpush1.msra.mxu0 0.0
    %926 = vmatprep.subr.mxu0 0.0
    %927 = vmatpush1.msra.mxu0 0.0
    %928 = vmatprep.subr.mxu0 0.0
    %929 = vmatpush1.msra.mxu0 0.0
    %930 = vmatprep.subr.mxu0 0.0
    %931 = vmatpush1.msra.mxu0 0.0
    %932 = vmatprep.subr.mxu0 0.0
    %933 = vmatpush1.msra.mxu0 0.0
    %934 = vmatprep.subr.mxu0 0.0
    %935 = vmatpush1.msra.mxu0 0.0
    %936 = vmatprep.subr.mxu0 0.0
    %937 = vmatpush1.msra.mxu0 0.0
    %938 = vmatprep.subr.mxu0 0.0
    %939 = vmatpush1.msra.mxu0 0.0
    %940 = vmatprep.subr.mxu0 0.0
    %941 = vmatpush1.msra.mxu0 0.0
    %942 = vmatprep.subr.mxu0 0.0
    %943 = vmatpush1.msra.mxu0 0.0
    %944 = vmatprep.subr.mxu0 0.0
    %945 = vmatpush1.msra.mxu0 0.0
    %946 = vmatprep.mubr.f32.mxu0 0.0
    %947 = vmatmul.mubr.f32.gmra.mrb[0].mxu0 %v880
    %v948 = vpop.f32.mrb[0].mxu0
    %v949 = vadd.f32 %v215, %v948
    %v950 = vpop.f32.mrb[0].mxu0
    %951 = vdwg.mxu0
    %v953 = vrot.slane %v949, 4
    %v955 = vadd.f32 %v203, %v953
    %v956 = vxor.u32 %v955, 2147483648
    %v957 = vmul.f32 %v956, 1.442695
    %v958 = vpow.pop %v957
    %v959 = vadd.f32 %v958, 1.0
    %v960 = vrcp.pop %v959
    %v961 = vmul.f32 1.0, %v960
    %962 = vrot.lane.b32.xlu0 %v953, 64
    %v963 = vpop.permute.xlu0 %962
    %v965 = vmul.f32 %v961, %v963
    %967 = vrot.lane.b32.xlu0 %v965, 64
    %v968 = vpop.permute.xlu0 %967
    %v970 = vadd.f32 %v203, %v968
    %v971 = vtanh.pop %v970
    %v972 = vsub.f32 1.0, %v961
    %974 = vrot.lane.b32.xlu0 %v971, 96
    %v975 = vpop.permute.xlu0 %974
    %v977 = vmul.f32 %v972, %v975
    %v978 = vrot.slane %v870, 6
    %v980 = vmul.f32 %v961, %v978
    %v981 = vadd.f32 %v977, %v980
    %983 = vrot.lane.b32.xlu0 %v981, 96
    %v984 = vpop.permute.xlu0 %983
    %986 = vst.msk [vmem:[#allocation2 + $0x2] sm:$0x10] %vm544, %v984
    %987 = vst.msk [vmem:[#allocation2 + $0x9] sm:$0x20] %vm546, %v984
    %v988 = vrot.slane %v981, 4
    %989 = vrot.lane.b32.xlu0 %v988, 96
    %v990 = vpop.permute.xlu0 %989
    %v991 = vsel %vm217, %v990, 0
    %993 = vmatprep.subr.mxu0 0.0
    %994 = vmatpush1.msra.mxu0 %v206
    %995 = vmatprep.subr.mxu0 0.0
    %996 = vmatpush1.msra.mxu0 %v207
    %997 = vmatprep.subr.mxu0 0.0
    %998 = vmatpush1.msra.mxu0 %v208
    %999 = vmatprep.subr.mxu0 0.0
    %1000 = vmatpush1.msra.mxu0 %v209
    %1001 = vmatprep.subr.mxu0 0.0
    %1002 = vmatpush1.msra.mxu0 0.0
    %1003 = vmatprep.subr.mxu0 0.0
    %1004 = vmatpush1.msra.mxu0 0.0
    %1005 = vmatprep.subr.mxu0 0.0
    %1006 = vmatpush1.msra.mxu0 0.0
    %1007 = vmatprep.subr.mxu0 0.0
    %1008 = vmatpush1.msra.mxu0 0.0
    %1009 = vmatprep.subr.mxu0 0.0
    %1010 = vmatpush1.msra.mxu0 0.0
    %1011 = vmatprep.subr.mxu0 0.0
    %1012 = vmatpush1.msra.mxu0 0.0
    %1013 = vmatprep.subr.mxu0 0.0
    %1014 = vmatpush1.msra.mxu0 0.0
    %1015 = vmatprep.subr.mxu0 0.0
    %1016 = vmatpush1.msra.mxu0 0.0
    %1017 = vmatprep.subr.mxu0 0.0
    %1018 = vmatpush1.msra.mxu0 0.0
    %1019 = vmatprep.subr.mxu0 0.0
    %1020 = vmatpush1.msra.mxu0 0.0
    %1021 = vmatprep.subr.mxu0 0.0
    %1022 = vmatpush1.msra.mxu0 0.0
    %1023 = vmatprep.subr.mxu0 0.0
    %1024 = vmatpush1.msra.mxu0 0.0
    %1025 = vmatprep.subr.mxu0 0.0
    %1026 = vmatpush1.msra.mxu0 0.0
    %1027 = vmatprep.subr.mxu0 0.0
    %1028 = vmatpush1.msra.mxu0 0.0
    %1029 = vmatprep.subr.mxu0 0.0
    %1030 = vmatpush1.msra.mxu0 0.0
    %1031 = vmatprep.subr.mxu0 0.0
    %1032 = vmatpush1.msra.mxu0 0.0
    %1033 = vmatprep.subr.mxu0 0.0
    %1034 = vmatpush1.msra.mxu0 0.0
    %1035 = vmatprep.subr.mxu0 0.0
    %1036 = vmatpush1.msra.mxu0 0.0
    %1037 = vmatprep.subr.mxu0 0.0
    %1038 = vmatpush1.msra.mxu0 0.0
    %1039 = vmatprep.subr.mxu0 0.0
    %1040 = vmatpush1.msra.mxu0 0.0
    %1041 = vmatprep.subr.mxu0 0.0
    %1042 = vmatpush1.msra.mxu0 0.0
    %1043 = vmatprep.subr.mxu0 0.0
    %1044 = vmatpush1.msra.mxu0 0.0
    %1045 = vmatprep.subr.mxu0 0.0
    %1046 = vmatpush1.msra.mxu0 0.0
    %1047 = vmatprep.subr.mxu0 0.0
    %1048 = vmatpush1.msra.mxu0 0.0
    %1049 = vmatprep.subr.mxu0 0.0
    %1050 = vmatpush1.msra.mxu0 0.0
    %1051 = vmatprep.subr.mxu0 0.0
    %1052 = vmatpush1.msra.mxu0 0.0
    %1053 = vmatprep.subr.mxu0 0.0
    %1054 = vmatpush1.msra.mxu0 0.0
    %1055 = vmatprep.subr.mxu0 0.0
    %1056 = vmatpush1.msra.mxu0 0.0
    %1057 = vmatprep.mubr.f32.mxu0 0.0
    %1058 = vmatmul.mubr.f32.gmra.mrb[0].mxu0 %v991
    %v1059 = vpop.f32.mrb[0].mxu0
    %v1060 = vadd.f32 %v215, %v1059
    %v1061 = vpop.f32.mrb[0].mxu0
    %1062 = vdwg.mxu0
    %v1064 = vrot.slane %v1060, 2
    %v1066 = vadd.f32 %v203, %v1064
    %v1067 = vxor.u32 %v1066, 2147483648
    %v1068 = vmul.f32 %v1067, 1.442695
    %v1069 = vpow.pop %v1068
    %v1070 = vadd.f32 %v1069, 1.0
    %v1071 = vrcp.pop %v1070
    %v1072 = vmul.f32 1.0, %v1071
    %1073 = vrot.lane.b32.xlu0 %v1064, 64
    %v1074 = vpop.permute.xlu0 %1073
    %v1076 = vmul.f32 %v1072, %v1074
    %1078 = vrot.lane.b32.xlu0 %v1076, 64
    %v1079 = vpop.permute.xlu0 %1078
    %v1081 = vadd.f32 %v203, %v1079
    %v1082 = vtanh.pop %v1081
    %v1083 = vsub.f32 1.0, %v1072
    %1085 = vrot.lane.b32.xlu0 %v1082, 96
    %v1086 = vpop.permute.xlu0 %1085
    %v1088 = vmul.f32 %v1083, %v1086
    %v1089 = vrot.slane %v981, 6
    %v1091 = vmul.f32 %v1072, %v1089
    %v1092 = vadd.f32 %v1088, %v1091
    %1094 = vrot.lane.b32.xlu0 %v1092, 96
    %v1095 = vpop.permute.xlu0 %1094
    %1097 = vst.msk [vmem:[#allocation2 + $0x1] sm:$0x40] %vm657, %v1095
    %1098 = vst.msk [vmem:[#allocation2 + $0x8] sm:$0x80] %vm659, %v1095
    %v1099 = vld [vmem:[#allocation2] sm:$0xff]
    %v1100 = vld [vmem:[#allocation2 + $0x8] sm:$0xff]
    %v1101 = vld [vmem:[%s5] sm:$0xff]
    %v1102 = vld [vmem:[%s5 + $0x8] sm:$0xff]
    %v1103 = vld [vmem:[%s5 + $0x10] sm:$0xff]
    %v1104 = vld [vmem:[%s5 + $0x18] sm:$0xff]
    %v1105 = vld [vmem:[#allocation8] sm:$0x1]
    %v1107 = vlaneseq
    %v1108 = vshrl.u32 %v1107, 7
    %v1109 = vsub.s32 0, %v1108
    %v1110 = vrot.slane %v1105, %v1109
    %v1113 = vsel %vm217, %v1099, 0
    %v1116 = vsel %vm217, %v1100, 0
    %1118 = vmatprep.subr.mxu0 0.0
    %1119 = vmatpush1.msra.mxu0 %v1101
    %1120 = vmatprep.subr.mxu0 0.0
    %1121 = vmatpush1.msra.mxu0 %v1102
    %1122 = vmatprep.subr.mxu0 0.0
    %1123 = vmatpush1.msra.mxu0 %v1103
    %1124 = vmatprep.subr.mxu0 0.0
    %1125 = vmatpush1.msra.mxu0 %v1104
    %1126 = vmatprep.subr.mxu0 0.0
    %1127 = vmatpush1.msra.mxu0 0.0
    %1128 = vmatprep.subr.mxu0 0.0
    %1129 = vmatpush1.msra.mxu0 0.0
    %1130 = vmatprep.subr.mxu0 0.0
    %1131 = vmatpush1.msra.mxu0 0.0
    %1132 = vmatprep.subr.mxu0 0.0
    %1133 = vmatpush1.msra.mxu0 0.0
    %1134 = vmatprep.subr.mxu0 0.0
    %1135 = vmatpush1.msra.mxu0 0.0
    %1136 = vmatprep.subr.mxu0 0.0
    %1137 = vmatpush1.msra.mxu0 0.0
    %1138 = vmatprep.subr.mxu0 0.0
    %1139 = vmatpush1.msra.mxu0 0.0
    %1140 = vmatprep.subr.mxu0 0.0
    %1141 = vmatpush1.msra.mxu0 0.0
    %1142 = vmatprep.subr.mxu0 0.0
    %1143 = vmatpush1.msra.mxu0 0.0
    %1144 = vmatprep.subr.mxu0 0.0
    %1145 = vmatpush1.msra.mxu0 0.0
    %1146 = vmatprep.subr.mxu0 0.0
    %1147 = vmatpush1.msra.mxu0 0.0
    %1148 = vmatprep.subr.mxu0 0.0
    %1149 = vmatpush1.msra.mxu0 0.0
    %1150 = vmatprep.subr.mxu0 0.0
    %1151 = vmatpush1.msra.mxu0 0.0
    %1152 = vmatprep.subr.mxu0 0.0
    %1153 = vmatpush1.msra.mxu0 0.0
    %1154 = vmatprep.subr.mxu0 0.0
    %1155 = vmatpush1.msra.mxu0 0.0
    %1156 = vmatprep.subr.mxu0 0.0
    %1157 = vmatpush1.msra.mxu0 0.0
    %1158 = vmatprep.subr.mxu0 0.0
    %1159 = vmatpush1.msra.mxu0 0.0
    %1160 = vmatprep.subr.mxu0 0.0
    %1161 = vmatpush1.msra.mxu0 0.0
    %1162 = vmatprep.subr.mxu0 0.0
    %1163 = vmatpush1.msra.mxu0 0.0
    %1164 = vmatprep.subr.mxu0 0.0
    %1165 = vmatpush1.msra.mxu0 0.0
    %1166 = vmatprep.subr.mxu0 0.0
    %1167 = vmatpush1.msra.mxu0 0.0
    %1168 = vmatprep.subr.mxu0 0.0
    %1169 = vmatpush1.msra.mxu0 0.0
    %1170 = vmatprep.subr.mxu0 0.0
    %1171 = vmatpush1.msra.mxu0 0.0
    %1172 = vmatprep.subr.mxu0 0.0
    %1173 = vmatpush1.msra.mxu0 0.0
    %1174 = vmatprep.subr.mxu0 0.0
    %1175 = vmatpush1.msra.mxu0 0.0
    %1176 = vmatprep.subr.mxu0 0.0
    %1177 = vmatpush1.msra.mxu0 0.0
    %1178 = vmatprep.subr.mxu0 0.0
    %1179 = vmatpush1.msra.mxu0 0.0
    %1180 = vmatprep.subr.mxu0 0.0
    %1181 = vmatpush1.msra.mxu0 0.0
    %1182 = vmatprep.mubr.f32.mxu0 0.0
    %1183 = vmatmul.mubr.f32.gmra.mrb[0].mxu0 %v1113
    %v1184 = vpop.f32.mrb[0].mxu0
    %v1185 = vadd.f32 %v1110, %v1184
    %v1186 = vpop.f32.mrb[0].mxu0
    %1187 = vmatprep.mubr.f32.mxu0 0.0
    %1188 = vmatmul.mubr.f32.gmra.mrb[0].mxu0 %v1116
    %v1189 = vpop.f32.mrb[0].mxu0
    %v1190 = vadd.f32 %v1110, %v1189
    %v1191 = vpop.f32.mrb[0].mxu0
    %1192 = vdwg.mxu0
    %v1193 = vtanh.pop %v1185
    %v1194 = vtanh.pop %v1190
    %v1195 = vld [vmem:[%s7] sm:$0xff]
    %v1196 = vld [vmem:[%s7 + $0x8] sm:$0xff]
    %v1197 = vld [vmem:[%s7 + $0x10] sm:$0xff]
    %v1198 = vld [vmem:[%s7 + $0x18] sm:$0xff]
    %v1199 = vld [vmem:[#allocation9] sm:$0x1]
    %v1201 = vlaneseq
    %v1202 = vshrl.u32 %v1201, 7
    %v1203 = vsub.s32 0, %v1202
    %v1204 = vrot.slane %v1199, %v1203
    %v1207 = vsel %vm217, %v1193, 0
    %v1210 = vsel %vm217, %v1194, 0
    %1212 = vmatprep.subr.mxu0 0.0
    %1213 = vmatpush1.msra.mxu0 %v1195
    %1214 = vmatprep.subr.mxu0 0.0
    %1215 = vmatpush1.msra.mxu0 %v1196
    %1216 = vmatprep.subr.mxu0 0.0
    %1217 = vmatpush1.msra.mxu0 %v1197
    %1218 = vmatprep.subr.mxu0 0.0
    %1219 = vmatpush1.msra.mxu0 %v1198
    %1220 = vmatprep.subr.mxu0 0.0
    %1221 = vmatpush1.msra.mxu0 0.0
    %1222 = vmatprep.subr.mxu0 0.0
    %1223 = vmatpush1.msra.mxu0 0.0
    %1224 = vmatprep.subr.mxu0 0.0
    %1225 = vmatpush1.msra.mxu0 0.0
    %1226 = vmatprep.subr.mxu0 0.0
    %1227 = vmatpush1.msra.mxu0 0.0
    %1228 = vmatprep.subr.mxu0 0.0
    %1229 = vmatpush1.msra.mxu0 0.0
    %1230 = vmatprep.subr.mxu0 0.0
    %1231 = vmatpush1.msra.mxu0 0.0
    %1232 = vmatprep.subr.mxu0 0.0
    %1233 = vmatpush1.msra.mxu0 0.0
    %1234 = vmatprep.subr.mxu0 0.0
    %1235 = vmatpush1.msra.mxu0 0.0
    %1236 = vmatprep.subr.mxu0 0.0
    %1237 = vmatpush1.msra.mxu0 0.0
    %1238 = vmatprep.subr.mxu0 0.0
    %1239 = vmatpush1.msra.mxu0 0.0
    %1240 = vmatprep.subr.mxu0 0.0
    %1241 = vmatpush1.msra.mxu0 0.0
    %1242 = vmatprep.subr.mxu0 0.0
    %1243 = vmatpush1.msra.mxu0 0.0
    %1244 = vmatprep.subr.mxu0 0.0
    %1245 = vmatpush1.msra.mxu0 0.0
    %1246 = vmatprep.subr.mxu0 0.0
    %1247 = vmatpush1.msra.mxu0 0.0
    %1248 = vmatprep.subr.mxu0 0.0
    %1249 = vmatpush1.msra.mxu0 0.0
    %1250 = vmatprep.subr.mxu0 0.0
    %1251 = vmatpush1.msra.mxu0 0.0
    %1252 = vmatprep.subr.mxu0 0.0
    %1253 = vmatpush1.msra.mxu0 0.0
    %1254 = vmatprep.subr.mxu0 0.0
    %1255 = vmatpush1.msra.mxu0 0.0
    %1256 = vmatprep.subr.mxu0 0.0
    %1257 = vmatpush1.msra.mxu0 0.0
    %1258 = vmatprep.subr.mxu0 0.0
    %1259 = vmatpush1.msra.mxu0 0.0
    %1260 = vmatprep.subr.mxu0 0.0
    %1261 = vmatpush1.msra.mxu0 0.0
    %1262 = vmatprep.subr.mxu0 0.0
    %1263 = vmatpush1.msra.mxu0 0.0
    %1264 = vmatprep.subr.mxu0 0.0
    %1265 = vmatpush1.msra.mxu0 0.0
    %1266 = vmatprep.subr.mxu0 0.0
    %1267 = vmatpush1.msra.mxu0 0.0
    %1268 = vmatprep.subr.mxu0 0.0
    %1269 = vmatpush1.msra.mxu0 0.0
    %1270 = vmatprep.subr.mxu0 0.0
    %1271 = vmatpush1.msra.mxu0 0.0
    %1272 = vmatprep.subr.mxu0 0.0
    %1273 = vmatpush1.msra.mxu0 0.0
    %1274 = vmatprep.subr.mxu0 0.0
    %1275 = vmatpush1.msra.mxu0 0.0
    %1276 = vmatprep.mubr.f32.mxu0 0.0
    %1277 = vmatmul.mubr.f32.gmra.mrb[0].mxu0 %v1207
    %v1278 = vpop.f32.mrb[0].mxu0
    %v1279 = vadd.f32 %v1204, %v1278
    %v1280 = vpop.f32.mrb[0].mxu0
    %1281 = vmatprep.mubr.f32.mxu0 0.0
    %1282 = vmatmul.mubr.f32.gmra.mrb[0].mxu0 %v1210
    %v1283 = vpop.f32.mrb[0].mxu0
    %v1284 = vadd.f32 %v1204, %v1283
    %v1285 = vpop.f32.mrb[0].mxu0
    %1286 = vdwg.mxu0
    %v1287 = vmul.f32 %v1279, 1.442695
    %v1288 = vpow.pop %v1287
    %v1289 = vmul.f32 %v1284, 1.442695
    %v1290 = vpow.pop %v1289
    %v1291 = vld [vmem:[%s9] sm:$0xff]
    %v1292 = vld [vmem:[%s9 + $0x8] sm:$0xff]
    %1295 = vrot.lane.b32.xlu0 %v1291, 8
    %v1296 = vpop.permute.xlu0 %1295
    %1297 = vrot.lane.b32.xlu0 %v1292, 8
    %v1298 = vpop.permute.xlu0 %1297
    %v1301 = vmul.f32 %v1288, %v1296
    %v1302 = vmul.f32 %v1290, %v1298
    %1305 = vrot.lane.b32.xlu0 %v1301, 120
    %v1306 = vpop.permute.xlu0 %1305
    %1307 = vrot.lane.b32.xlu0 %v1302, 120
    %v1308 = vpop.permute.xlu0 %1307
    %v1311 = vadd.f32 %v1279, %v1306
    %v1312 = vadd.f32 %v1284, %v1308
    %v1313 = vld [vmem:[#allocation11] sm:$0xff]
    %v1314 = vld [vmem:[%s11] sm:$0x1]
    %v1316 = vlaneseq
    %v1317 = vshrl.u32 %v1316, 7
    %v1318 = vsub.s32 0, %v1317
    %v1319 = vrot.slane %v1314, %v1318
    %vm1321 = vcmask 64512
    %v1323 = vsel %vm1321, %v1311, 0
    %v1326 = vsel %vm1321, %v1312, 0
    %1328 = vmatprep.subr.mxu0 0.0
    %1329 = vmatpush1.msra.mxu0 %v1313
    %1330 = vmatprep.subr.mxu0 0.0
    %1331 = vmatpush1.msra.mxu0 0.0
    %1332 = vmatprep.subr.mxu0 0.0
    %1333 = vmatpush1.msra.mxu0 0.0
    %1334 = vmatprep.subr.mxu0 0.0
    %1335 = vmatpush1.msra.mxu0 0.0
    %1336 = vmatprep.subr.mxu0 0.0
    %1337 = vmatpush1.msra.mxu0 0.0
    %1338 = vmatprep.subr.mxu0 0.0
    %1339 = vmatpush1.msra.mxu0 0.0
    %1340 = vmatprep.subr.mxu0 0.0
    %1341 = vmatpush1.msra.mxu0 0.0
    %1342 = vmatprep.subr.mxu0 0.0
    %1343 = vmatpush1.msra.mxu0 0.0
    %1344 = vmatprep.subr.mxu0 0.0
    %1345 = vmatpush1.msra.mxu0 0.0
    %1346 = vmatprep.subr.mxu0 0.0
    %1347 = vmatpush1.msra.mxu0 0.0
    %1348 = vmatprep.subr.mxu0 0.0
    %1349 = vmatpush1.msra.mxu0 0.0
    %1350 = vmatprep.subr.mxu0 0.0
    %1351 = vmatpush1.msra.mxu0 0.0
    %1352 = vmatprep.subr.mxu0 0.0
    %1353 = vmatpush1.msra.mxu0 0.0
    %1354 = vmatprep.subr.mxu0 0.0
    %1355 = vmatpush1.msra.mxu0 0.0
    %1356 = vmatprep.subr.mxu0 0.0
    %1357 = vmatpush1.msra.mxu0 0.0
    %1358 = vmatprep.subr.mxu0 0.0
    %1359 = vmatpush1.msra.mxu0 0.0
    %1360 = vmatprep.subr.mxu0 0.0
    %1361 = vmatpush1.msra.mxu0 0.0
    %1362 = vmatprep.subr.mxu0 0.0
    %1363 = vmatpush1.msra.mxu0 0.0
    %1364 = vmatprep.subr.mxu0 0.0
    %1365 = vmatpush1.msra.mxu0 0.0
    %1366 = vmatprep.subr.mxu0 0.0
    %1367 = vmatpush1.msra.mxu0 0.0
    %1368 = vmatprep.subr.mxu0 0.0
    %1369 = vmatpush1.msra.mxu0 0.0
    %1370 = vmatprep.subr.mxu0 0.0
    %1371 = vmatpush1.msra.mxu0 0.0
    %1372 = vmatprep.subr.mxu0 0.0
    %1373 = vmatpush1.msra.mxu0 0.0
    %1374 = vmatprep.subr.mxu0 0.0
    %1375 = vmatpush1.msra.mxu0 0.0
    %1376 = vmatprep.subr.mxu0 0.0
    %1377 = vmatpush1.msra.mxu0 0.0
    %1378 = vmatprep.subr.mxu0 0.0
    %1379 = vmatpush1.msra.mxu0 0.0
    %1380 = vmatprep.subr.mxu0 0.0
    %1381 = vmatpush1.msra.mxu0 0.0
    %1382 = vmatprep.subr.mxu0 0.0
    %1383 = vmatpush1.msra.mxu0 0.0
    %1384 = vmatprep.subr.mxu0 0.0
    %1385 = vmatpush1.msra.mxu0 0.0
    %1386 = vmatprep.subr.mxu0 0.0
    %1387 = vmatpush1.msra.mxu0 0.0
    %1388 = vmatprep.subr.mxu0 0.0
    %1389 = vmatpush1.msra.mxu0 0.0
    %1390 = vmatprep.subr.mxu0 0.0
    %1391 = vmatpush1.msra.mxu0 0.0
    %1392 = vmatprep.mubr.f32.mxu0 0.0
    %1393 = vmatmul.mubr.f32.gmra.mrb[0].mxu0 %v1323
    %v1394 = vpop.f32.mrb[0].mxu0
    %v1395 = vadd.f32 %v1319, %v1394
    %v1396 = vpop.f32.mrb[0].mxu0
    %1397 = vmatprep.mubr.f32.mxu0 0.0
    %1398 = vmatmul.mubr.f32.gmra.mrb[0].mxu0 %v1326
    %v1399 = vpop.f32.mrb[0].mxu0
    %v1400 = vadd.f32 %v1319, %v1399
    %v1401 = vpop.f32.mrb[0].mxu0
    %1402 = vdwg.mxu0
    %v1403 = vtanh.pop %v1395
    %v1404 = vtanh.pop %v1400
    %v1405 = vld [vmem:[%s12] sm:$0xff]
    %v1406 = vld [vmem:[%s12 + $0x8] sm:$0xff]
    %v1407 = vld [vmem:[%s12 + $0x10] sm:$0xff]
    %v1408 = vld [vmem:[%s12 + $0x18] sm:$0xff]
    %v1409 = vld [vmem:[%s13] sm:$0x1]
    %v1411 = vlaneseq
    %v1412 = vshrl.u32 %v1411, 7
    %v1413 = vsub.s32 0, %v1412
    %v1414 = vrot.slane %v1409, %v1413
    %v1417 = vsel %vm217, %v1403, 0
    %v1420 = vsel %vm217, %v1404, 0
    %1422 = vmatprep.subr.mxu0 0.0
    %1423 = vmatpush1.msra.mxu0 %v1405
    %1424 = vmatprep.subr.mxu0 0.0
    %1425 = vmatpush1.msra.mxu0 %v1406
    %1426 = vmatprep.subr.mxu0 0.0
    %1427 = vmatpush1.msra.mxu0 %v1407
    %1428 = vmatprep.subr.mxu0 0.0
    %1429 = vmatpush1.msra.mxu0 %v1408
    %1430 = vmatprep.subr.mxu0 0.0
    %1431 = vmatpush1.msra.mxu0 0.0
    %1432 = vmatprep.subr.mxu0 0.0
    %1433 = vmatpush1.msra.mxu0 0.0
    %1434 = vmatprep.subr.mxu0 0.0
    %1435 = vmatpush1.msra.mxu0 0.0
    %1436 = vmatprep.subr.mxu0 0.0
    %1437 = vmatpush1.msra.mxu0 0.0
    %1438 = vmatprep.subr.mxu0 0.0
    %1439 = vmatpush1.msra.mxu0 0.0
    %1440 = vmatprep.subr.mxu0 0.0
    %1441 = vmatpush1.msra.mxu0 0.0
    %1442 = vmatprep.subr.mxu0 0.0
    %1443 = vmatpush1.msra.mxu0 0.0
    %1444 = vmatprep.subr.mxu0 0.0
    %1445 = vmatpush1.msra.mxu0 0.0
    %1446 = vmatprep.subr.mxu0 0.0
    %1447 = vmatpush1.msra.mxu0 0.0
    %1448 = vmatprep.subr.mxu0 0.0
    %1449 = vmatpush1.msra.mxu0 0.0
    %1450 = vmatprep.subr.mxu0 0.0
    %1451 = vmatpush1.msra.mxu0 0.0
    %1452 = vmatprep.subr.mxu0 0.0
    %1453 = vmatpush1.msra.mxu0 0.0
    %1454 = vmatprep.subr.mxu0 0.0
    %1455 = vmatpush1.msra.mxu0 0.0
    %1456 = vmatprep.subr.mxu0 0.0
    %1457 = vmatpush1.msra.mxu0 0.0
    %1458 = vmatprep.subr.mxu0 0.0
    %1459 = vmatpush1.msra.mxu0 0.0
    %1460 = vmatprep.subr.mxu0 0.0
    %1461 = vmatpush1.msra.mxu0 0.0
    %1462 = vmatprep.subr.mxu0 0.0
    %1463 = vmatpush1.msra.mxu0 0.0
    %1464 = vmatprep.subr.mxu0 0.0
    %1465 = vmatpush1.msra.mxu0 0.0
    %1466 = vmatprep.subr.mxu0 0.0
    %1467 = vmatpush1.msra.mxu0 0.0
    %1468 = vmatprep.subr.mxu0 0.0
    %1469 = vmatpush1.msra.mxu0 0.0
    %1470 = vmatprep.subr.mxu0 0.0
    %1471 = vmatpush1.msra.mxu0 0.0
    %1472 = vmatprep.subr.mxu0 0.0
    %1473 = vmatpush1.msra.mxu0 0.0
    %1474 = vmatprep.subr.mxu0 0.0
    %1475 = vmatpush1.msra.mxu0 0.0
    %1476 = vmatprep.subr.mxu0 0.0
    %1477 = vmatpush1.msra.mxu0 0.0
    %1478 = vmatprep.subr.mxu0 0.0
    %1479 = vmatpush1.msra.mxu0 0.0
    %1480 = vmatprep.subr.mxu0 0.0
    %1481 = vmatpush1.msra.mxu0 0.0
    %1482 = vmatprep.subr.mxu0 0.0
    %1483 = vmatpush1.msra.mxu0 0.0
    %1484 = vmatprep.subr.mxu0 0.0
    %1485 = vmatpush1.msra.mxu0 0.0
    %1486 = vmatprep.mubr.f32.mxu0 0.0
    %1487 = vmatmul.mubr.f32.gmra.mrb[0].mxu0 %v1417
    %v1488 = vpop.f32.mrb[0].mxu0
    %v1489 = vadd.f32 %v1414, %v1488
    %v1490 = vpop.f32.mrb[0].mxu0
    %1491 = vmatprep.mubr.f32.mxu0 0.0
    %1492 = vmatmul.mubr.f32.gmra.mrb[0].mxu0 %v1420
    %v1493 = vpop.f32.mrb[0].mxu0
    %v1494 = vadd.f32 %v1414, %v1493
    %v1495 = vpop.f32.mrb[0].mxu0
    %1496 = vdwg.mxu0
    %vm1497 = vcmask 326656
    %1498 = vst.msk [vmem:[#allocation12] sm:$0xff] %vm1497, %v1489
    %1499 = vst.msk [vmem:[#allocation12 + $0x8] sm:$0xff] %vm1497, %v1494
    %1500 = vst.msk [vmem:[%s15] sm:$0xff] %vm1321, %v1279
    %1501 = vst.msk [vmem:[%s15 + $0x8] sm:$0xff] %vm1321, %v1284
    %1504 = vrot.lane.b32.xlu0 %v1279, 120
    %v1505 = vpop.permute.xlu0 %1504
    %1506 = vrot.lane.b32.xlu0 %v1284, 120
    %v1507 = vpop.permute.xlu0 %1506
    %1510 = vst.msk [vmem:[%s16] sm:$0xff] %vm1321, %v1505
    %1511 = vst.msk [vmem:[%s16 + $0x8] sm:$0xff] %vm1321, %v1507
    // Predicated region
    $region78: #{tpu_custom_call.1} parent=1 // pred_check
      _
    $region79: #{tpu_custom_call.1} parent=1 // pred_check_branch
      %1513 = sbr.rel (0) target = $region81
    $region80: #{tpu_custom_call.1} parent=1 // pred_region
      %s1515 = ssub.s32 256, 256
      %1516 = vsyncadd [#allocation5], %s1515
      %s1517 = sshll.u32 [#allocation12], 4
      %s1518 = int_to_ptr.vmem [resolvable:$true] %s1517
      %1523 = dma.vmem_to_hbm [thread:$0]  %s1518, 256, %s14, [#allocation5], 128, 128, 8
    $region81: #{tpu_custom_call.1} parent=1 // pred_fallthru
      _
    // Predicated region
    $region82: #{tpu_custom_call.1} parent=1 // pred_check
      _
    $region83: #{tpu_custom_call.1} parent=1 // pred_check_branch
      %1525 = sbr.rel (0) target = $region85
    $region84: #{tpu_custom_call.1} parent=1 // pred_region
      _
    $region85: #{tpu_custom_call.1} parent=1 // pred_fallthru
      _
    // Predicated region
    $region86: #{tpu_custom_call.1} parent=1 // pred_check
      _
    $region87: #{tpu_custom_call.1} parent=1 // pred_check_branch
      %1527 = sbr.rel (0) target = $region89
    $region88: #{tpu_custom_call.1} parent=1 // pred_region
      _
    $region89: #{tpu_custom_call.1} parent=1 // pred_fallthru
      _
    // Predicated region
    $region90: #{tpu_custom_call.1} parent=1 // pred_check
      _
    $region91: #{tpu_custom_call.1} parent=1 // pred_check_branch
      %1529 = sbr.rel (0) target = $region93
    $region92: #{tpu_custom_call.1} parent=1 // pred_region
      %1530 = dma.done [#allocation5], 256
    $region93: #{tpu_custom_call.1} parent=1 // pred_fallthru
      _
    // Predicated region
    $region94: #{tpu_custom_call.1} parent=1 // pred_check
      _
    $region95: #{tpu_custom_call.1} parent=1 // pred_check_branch
      %1532 = sbr.rel (0) target = $region97
    $region96: #{tpu_custom_call.1} parent=1 // pred_region
      _
    $region97: #{tpu_custom_call.1} parent=1 // pred_fallthru
      _
    // Predicated region
    $region98: #{tpu_custom_call.1} parent=1 // pred_check
      _
    $region99: #{tpu_custom_call.1} parent=1 // pred_check_branch
      %1534 = sbr.rel (0) target = $region101
    $region100: #{tpu_custom_call.1} parent=1 // pred_region
      _
    $region101: #{tpu_custom_call.1} parent=1 // pred_fallthru
      _
    %1535 = vsyncpa [#allocation4], 1
    %1536 = vsyncpa [#allocation7], 1
    %1537 = vsyncpa [#allocation10], 1
    %1538 = vsyncpa [#allocation5], 1

</llo_original>
